<compile_context>
chip_gen: v5e
topology: v5e:2x2
jax: 0.10.0
libtpu: 0.0.40
codegen_flags: <defaults>
</compile_context>

<pallas_src>
import functools

import jax
import jax.numpy as jnp
from jax import lax
from jax.experimental import pallas as pl
from jax.experimental.pallas import tpu as pltpu


def _ta_relation_kernel(
    feat_ref, coord_ref, lang_ref, mask_ref, idx_ref,
    relw_ref, lw1_ref, fw1_ref, w2_ref, b_ref,
    out_ref, *, num_obj, k1):
    f32, bf16 = jnp.float32, jnp.bfloat16
    ts, n, pc_id = feat_ref.shape
    _, seq, lang_id = lang_ref.shape
    dp = out_ref.shape[-1]
    k1n = k1 * n

    # --- Hoisted weight / bias loads (shared by all TS sentences in the block).
    relw = relw_ref[...]                                   # (10, Dp) f32
    w_ce, w_cc, w_rc, w_d = relw[0:3], relw[3:6], relw[6:9], relw[9:10]
    b = b_ref[...]                                         # (6, Dp) f32
    rb1, lb1, fb1, rb2, lb2, fb2 = (b[i:i + 1] for i in range(6))
    w2_rel, w2_lang, w2_feat = w2_ref[0], w2_ref[1], w2_ref[2]   # (Dp, Dp) bf16

    # --- Batched feat / lang encoders over all TS sentences (bf16 MXU operands,
    #     f32 accumulation; elementwise math stays f32).
    feat_all = feat_ref[...].reshape(ts * n, pc_id)
    fe = jnp.dot(feat_all.astype(bf16), fw1_ref[...], preferred_element_type=f32) + fb1
    fe = jnp.maximum(fe, 0.0)
    fe = jnp.dot(fe.astype(bf16), w2_feat, preferred_element_type=f32) + fb2
    fe = fe.reshape(ts, n, dp)                             # (TS, N, Dp)

    lang_all = lang_ref[...].reshape(ts * seq, lang_id)
    le = jnp.dot(lang_all.astype(bf16), lw1_ref[...], preferred_element_type=f32) + lb1
    le = jnp.maximum(le, 0.0)
    le = jnp.dot(le.astype(bf16), w2_lang, preferred_element_type=f32) + lb2
    le = le.reshape(ts, seq, dp)                           # (TS, L, Dp)

    iota_n = lax.broadcasted_iota(jnp.int32, (k1n, n), 1)

    # --- Per-sentence attention / relation-gather stage (small; static loop,
    #     TS is capped at 8 by the wrapper).
    for s in range(ts):
        coord_s = coord_ref[s]                             # (N, 3)   f32
        onehot = (iota_n == idx_ref[s]).astype(f32)        # (K1N, N) f32, exact 0/1

        # rel encoder built in-kernel from coords (no rel10 / gmat HBM stream).
        ce = jnp.dot(onehot, coord_s, preferred_element_type=f32)            # neighbor coords
        cc = jnp.broadcast_to(coord_s[None], (k1, n, 3)).reshape(k1n, 3)     # center coords
        rc = ce - cc
        dist = jnp.sqrt(jnp.sum(rc * rc, axis=-1, keepdims=True))            # (K1N, 1)
        h1 = (jnp.dot(ce, w_ce, preferred_element_type=f32)
              + jnp.dot(cc, w_cc, preferred_element_type=f32)
              + jnp.dot(rc, w_rc, preferred_element_type=f32)
              + dist * w_d + rb1)
        rel_e = jnp.maximum(h1, 0.0)
        rel_e = jnp.dot(rel_e.astype(bf16), w2_rel, preferred_element_type=f32) + rb2  # (K1N, Dp)

        # Attention over the N unique objects (softmax / renorm / attn@lang are
        # row-wise, so per-unique-object then gather is exact).  Kept f32.
        fe_s, le_s = fe[s], le[s]
        logits = lax.dot_general(fe_s, le_s,
                                 dimension_numbers=(((1,), (1,)), ((), ())),
                                 preferred_element_type=f32)                  # (N, L)
        p = jnp.exp(logits - jnp.max(logits, axis=-1, keepdims=True))
        p = p * pl.reciprocal(jnp.sum(p, axis=-1, keepdims=True), approx=True)
        p = p * mask_ref[s]
        p = p * pl.reciprocal(jnp.sum(p, axis=-1, keepdims=True) + 1e-7, approx=True)
        ins = jnp.dot(p, le_s, preferred_element_type=f32)                    # (N, Dp) f32
        fa = fe_s * ins                                                       # (N, Dp)

        # Exact f32 one-hot gather of per-neighbor rows, fuse with rel encoding,
        # then group-sum over the k+1 neighbors with one reshape-reduce.
        gath = jnp.dot(onehot, fa, preferred_element_type=f32)                # (K1N, Dp)
        prod = gath * rel_e
        group = jnp.sum(prod.reshape(k1, n, dp), axis=0)                      # (N, Dp)
        out_ref[s] = group + fe_s


def ta_relation_conv(params, feat, coord, lang_feat, lang_len, k, *, max_ts=8):
    (rw1, rb1, rw2, rb2, lw1, lb1, lw2, lb2, fw1, fb1, fw2, fb2) = params
    f32, bf16 = jnp.float32, jnp.bfloat16
    S, N, pc_id = feat.shape
    _, L, lang_id = lang_feat.shape
    D = fw2.shape[-1]
    assert lw2.shape[-1] == D, "lang_od must equal pc_od for the fused forward"
    k = min(k, N - 1)
    k1 = k + 1
    k1n = k1 * N

    # Lane-dense hidden width: zero-padded weight columns keep the math exact
    # (pad columns stay identically 0 end-to-end); pad sliced off after the call.
    Dp = ((D + 127) // 128) * 128

    def pad_cols(w):
        return jnp.pad(w, ((0, 0), (0, Dp - D)))

    relw = pad_cols(rw1).astype(f32)                                    # (10, Dp)  f32
    lw1_b = pad_cols(lw1).astype(bf16)                                  # (lang_id, Dp)
    fw1_b = pad_cols(fw1).astype(bf16)                                  # (pc_id, Dp)
    w2_slab = jnp.stack([rw2, lw2, fw2], axis=0)
    w2_slab = jnp.pad(w2_slab, ((0, 0), (0, Dp - D), (0, Dp - D))).astype(bf16)  # (3,Dp,Dp)
    b_slab = jnp.concatenate([rb1, lb1, fb1, rb2, lb2, fb2], axis=0)    # (6, D)
    b_slab = pad_cols(b_slab).astype(f32)                               # (6, Dp)

    # Wrapper-side kNN (top_k has no clean Pallas equivalent).  Only the int32
    # neighbor-major indices go to the kernel: row j*N+i <-> (object i, nbr j).
    d2 = jnp.sum((coord[:, None, :, :] - coord[:, :, None, :]) ** 2, axis=-1)
    _, idx = lax.top_k(-d2, k1)                                         # (S, N, k1)
    idx_nm = jnp.transpose(idx, (0, 2, 1)).reshape(S, k1n, 1).astype(jnp.int32)

    mask = (jnp.arange(L)[None, :] < lang_len[:, None]).astype(f32)[:, None, :]  # (S,1,L)

    # Sentence batching: TS sentences per grid step (amortize per-step overhead,
    # bigger MXU M-dim); keep >= 2 grid blocks when possible for v7x's 2 TCs.
    ts = max(1, min(max_ts, S // 2)) if S > 1 else 1
    Sp = ((S + ts - 1) // ts) * ts
    if Sp != S:
        pad_s = Sp - S
        feat = jnp.pad(feat, ((0, pad_s), (0, 0), (0, 0)))
        coord = jnp.pad(coord, ((0, pad_s), (0, 0), (0, 0)))
        lang_feat = jnp.pad(lang_feat, ((0, pad_s), (0, 0), (0, 0)))
        mask = jnp.pad(mask, ((0, pad_s), (0, 0), (0, 0)))
        idx_nm = jnp.pad(idx_nm, ((0, pad_s), (0, 0), (0, 0)))

    kernel = functools.partial(_ta_relation_kernel, num_obj=N, k1=k1)

    flops = 2 * Sp * (N * pc_id * Dp + N * Dp * Dp
                      + L * lang_id * Dp + L * Dp * Dp
                      + k1n * 9 * Dp + k1n * Dp * Dp
                      + k1n * N * (3 + Dp)
                      + 2 * N * L * Dp)
    bytes_accessed = ((feat.size + coord.size + lang_feat.size + mask.size) * 4
                      + idx_nm.size * 4 + Sp * N * Dp * 4
                      + (relw.size + b_slab.size) * 4
                      + (lw1_b.size + fw1_b.size + w2_slab.size) * 2)
    cost = pl.CostEstimate(flops=int(flops),
                           transcendentals=int(Sp * (N * L + k1n + 2 * N)),
                           bytes_accessed=int(bytes_accessed))

    out = pl.pallas_call(
        kernel,
        out_shape=jax.ShapeDtypeStruct((Sp, N, Dp), f32),
        grid=(Sp // ts,),
        in_specs=[
            pl.BlockSpec((ts, N, pc_id), lambda s: (s, 0, 0)),
            pl.BlockSpec((ts, N, 3), lambda s: (s, 0, 0)),
            pl.BlockSpec((ts, L, lang_id), lambda s: (s, 0, 0)),
            pl.BlockSpec((ts, 1, L), lambda s: (s, 0, 0)),
            pl.BlockSpec((ts, k1n, 1), lambda s: (s, 0, 0)),
            pl.BlockSpec((10, Dp), lambda s: (0, 0)),
            pl.BlockSpec((lang_id, Dp), lambda s: (0, 0)),
            pl.BlockSpec((pc_id, Dp), lambda s: (0, 0)),
            pl.BlockSpec((3, Dp, Dp), lambda s: (0, 0, 0)),
            pl.BlockSpec((6, Dp), lambda s: (0, 0)),
        ],
        out_specs=pl.BlockSpec((ts, N, Dp), lambda s: (s, 0, 0)),
        compiler_params=pltpu.CompilerParams(
            dimension_semantics=("parallel",),
            vmem_limit_bytes=32 * 1024 * 1024),
        cost_estimate=cost,
    )(feat, coord, lang_feat, mask, idx_nm, relw, lw1_b, fw1_b, w2_slab, b_slab)

    feat_out = out[:S, :, :D]
    # TODO(synk): when N >= 128, emit score as a second lane-dense kernel output
    # instead of re-reading feat_out from HBM here.
    score = jnp.sum(feat_out, axis=-1)
    return feat_out, score


def reference_forward(params, feat, coord, lang_feat, lang_len, k):
    """Pure-JAX f32 mirror of the PyTorch forward, for a correctness check."""
    (rw1, rb1, rw2, rb2, lw1, lb1, lw2, lb2, fw1, fb1, fw2, fb2) = params

    def mlp(x, w1, b1, w2, b2):
        return jnp.maximum(x @ w1 + b1, 0.0) @ w2 + b2

    S, N, _ = feat.shape
    k = min(k, N - 1)
    k1 = k + 1
    d2 = jnp.sum((coord[:, None, :, :] - coord[:, :, None, :]) ** 2, -1)
    _, idx = jax.lax.top_k(-d2, k1)
    gather = jax.vmap(lambda a, i: a[i])
    coord_expand = gather(coord, idx)
    coord_center = jnp.broadcast_to(coord[:, :, None, :], coord_expand.shape)
    rel_coord = coord_expand - coord_center
    dist = jnp.linalg.norm(rel_coord, axis=-1, keepdims=True)
    rel = jnp.concatenate([coord_expand, coord_center, rel_coord, dist], -1)
    rel = mlp(rel, rw1, rb1, rw2, rb2)                                     # (S,N,K1,D)
    _, L, _ = lang_feat.shape
    mask = (jnp.arange(L)[None, :] < lang_len[:, None]).astype(jnp.float32)[:, None, :]
    lang_e = mlp(lang_feat, lw1, lb1, lw2, lb2)                            # (S,L,D)
    feat_e = mlp(feat, fw1, fb1, fw2, fb2)                                 # (S,N,D)
    featg_e = gather(feat_e, idx)                                          # (S,N,K1,D)
    attn = jnp.einsum('snkd,sld->snkl', featg_e, lang_e).reshape(S, N * k1, L)
    attn = jax.nn.softmax(attn, -1) * mask
    attn = attn / (attn.sum(-1, keepdims=True) + 1e-7)
    ins = jnp.einsum('sml,sld->smd', attn, lang_e).reshape(S, N, k1, -1)
    feat_out = (featg_e * ins * rel).sum(2) + feat_e
    score = feat_out.sum(-1)
    return feat_out, score


def init_params(key, lang_id, lang_od, pc_id, pc_od):
    keys = jax.random.split(key, 12)

    def lin(kw, kb, fan_in, fan_out):
        w = jax.random.normal(kw, (fan_in, fan_out), jnp.float32) / jnp.sqrt(fan_in)
        b = jax.random.normal(kb, (1, fan_out), jnp.float32) * 0.01
        return w, b

    rw1, rb1 = lin(keys[0], keys[1], 10, lang_od)
    rw2, rb2 = lin(keys[2], keys[3], lang_od, lang_od)
    lw1, lb1 = lin(keys[4], keys[5], lang_id, lang_od)
    lw2, lb2 = lin(keys[6], keys[7], lang_od, lang_od)
    fw1, fb1 = lin(keys[8], keys[9], pc_id, pc_od)
    fw2, fb2 = lin(keys[10], keys[11], pc_od, pc_od)
    return [rw1, rb1, rw2, rb2, lw1, lb1, lw2, lb2, fw1, fb1, fw2, fb2]


if __name__ == "__main__":
    # Small shapes consistent with the module's forward.
    num_sen, num_obj = 2, 16
    pc_id, lang_id = 32, 32
    lang_od = pc_od = 32   # must match for the bmm / elementwise fuse in forward
    max_len, k = 8, 4

    key = jax.random.PRNGKey(0)
    k_feat, k_coord, k_lang, k_param = jax.random.split(key, 4)

    feat = jax.random.normal(k_feat, (num_sen, num_obj, pc_id), jnp.float32)
    coord = jax.random.normal(k_coord, (num_sen, num_obj, 3), jnp.float32)
    lang_feat = jax.random.normal(k_lang, (num_sen, max_len, lang_id), jnp.float32)
    lang_len = jnp.array([5, 8], jnp.int32)

    params = init_params(k_param, lang_id, lang_od, pc_id, pc_od)

    feat_out, score = ta_relation_conv(params, feat, coord, lang_feat, lang_len, k)
    feat_out = jax.block_until_ready(feat_out)
    score = jax.block_until_ready(score)

    ref_feat, ref_score = reference_forward(params, feat, coord, lang_feat, lang_len, k)

    assert feat_out.shape == (num_sen, num_obj, pc_od)
    assert score.shape == (num_sen, num_obj)
    assert jnp.allclose(feat_out, ref_feat, atol=5e-2, rtol=5e-2)
    assert jnp.allclose(score, ref_score, atol=5e-2, rtol=5e-2)

    print("KERNEL_OK")
</pallas_src>

<mosaic_0001>
module attributes {stable_mosaic.version = 11 : i64} {
  func.func @_ta_relation_kernel(%arg0: i32, %arg1: memref<1x16x32xf32, #tpu.memory_space<vmem>>, %arg2: memref<1x16x3xf32, #tpu.memory_space<vmem>>, %arg3: memref<1x8x32xf32, #tpu.memory_space<vmem>>, %arg4: memref<1x1x8xf32, #tpu.memory_space<vmem>>, %arg5: memref<1x80x1xi32, #tpu.memory_space<vmem>>, %arg6: memref<10x128xf32, #tpu.memory_space<vmem>>, %arg7: memref<32x128xbf16, #tpu.memory_space<vmem>>, %arg8: memref<32x128xbf16, #tpu.memory_space<vmem>>, %arg9: memref<3x128x128xbf16, #tpu.memory_space<vmem>>, %arg10: memref<6x128xf32, #tpu.memory_space<vmem>>, %arg11: memref<1x16x128xf32, #tpu.memory_space<vmem>>) attributes {dimension_semantics = [#tpu.dimension_semantics<parallel>], iteration_bounds = array<i64: 2>, scalar_prefetch = 0 : i64, scratch_operands = 0 : i64, tpu.core_type = #tpu.core_type<tc>, window_params = [{transform_indices = @transform_0, window_bounds = array<i64: 1, 16, 32>}, {transform_indices = @transform_1, window_bounds = array<i64: 1, 16, 3>}, {transform_indices = @transform_2, window_bounds = array<i64: 1, 8, 32>}, {transform_indices = @transform_3, window_bounds = array<i64: 1, 1, 8>}, {transform_indices = @transform_4, window_bounds = array<i64: 1, 80, 1>}, {pipeline_mode = #tpu.pipeline_mode<synchronous>, transform_indices = @transform_5, window_bounds = array<i64: 10, 128>}, {pipeline_mode = #tpu.pipeline_mode<synchronous>, transform_indices = @transform_6, window_bounds = array<i64: 32, 128>}, {pipeline_mode = #tpu.pipeline_mode<synchronous>, transform_indices = @transform_7, window_bounds = array<i64: 32, 128>}, {pipeline_mode = #tpu.pipeline_mode<synchronous>, transform_indices = @transform_8, window_bounds = array<i64: 3, 128, 128>}, {pipeline_mode = #tpu.pipeline_mode<synchronous>, transform_indices = @transform_9, window_bounds = array<i64: 6, 128>}, {transform_indices = @transform_10, window_bounds = array<i64: 1, 16, 128>}]} {
    %c0 = arith.constant 0 : index
    %c0_0 = arith.constant 0 : index
    %0 = vector.load %arg6[%c0, %c0_0] : memref<10x128xf32, #tpu.memory_space<vmem>>, vector<10x128xf32>
    %1 = vector.extract_strided_slice %0 {offsets = [0, 0], sizes = [3, 128], strides = [1, 1]} : vector<10x128xf32> to vector<3x128xf32>
    %2 = vector.extract_strided_slice %0 {offsets = [3, 0], sizes = [3, 128], strides = [1, 1]} : vector<10x128xf32> to vector<3x128xf32>
    %3 = vector.extract_strided_slice %0 {offsets = [6, 0], sizes = [3, 128], strides = [1, 1]} : vector<10x128xf32> to vector<3x128xf32>
    %4 = vector.extract_strided_slice %0 {offsets = [9, 0], sizes = [1, 128], strides = [1, 1]} : vector<10x128xf32> to vector<1x128xf32>
    %c0_1 = arith.constant 0 : index
    %c0_2 = arith.constant 0 : index
    %5 = vector.load %arg10[%c0_1, %c0_2] : memref<6x128xf32, #tpu.memory_space<vmem>>, vector<6x128xf32>
    %6 = vector.extract_strided_slice %5 {offsets = [0, 0], sizes = [1, 128], strides = [1, 1]} : vector<6x128xf32> to vector<1x128xf32>
    %7 = vector.extract_strided_slice %5 {offsets = [1, 0], sizes = [1, 128], strides = [1, 1]} : vector<6x128xf32> to vector<1x128xf32>
    %8 = vector.extract_strided_slice %5 {offsets = [2, 0], sizes = [1, 128], strides = [1, 1]} : vector<6x128xf32> to vector<1x128xf32>
    %9 = vector.extract_strided_slice %5 {offsets = [3, 0], sizes = [1, 128], strides = [1, 1]} : vector<6x128xf32> to vector<1x128xf32>
    %10 = vector.extract_strided_slice %5 {offsets = [4, 0], sizes = [1, 128], strides = [1, 1]} : vector<6x128xf32> to vector<1x128xf32>
    %11 = vector.extract_strided_slice %5 {offsets = [5, 0], sizes = [1, 128], strides = [1, 1]} : vector<6x128xf32> to vector<1x128xf32>
    %c0_3 = arith.constant 0 : index
    %c0_4 = arith.constant 0 : index
    %c0_5 = arith.constant 0 : index
    %12 = vector.load %arg9[%c0_3, %c0_4, %c0_5] : memref<3x128x128xbf16, #tpu.memory_space<vmem>>, vector<1x128x128xbf16>
    %13 = vector.shape_cast %12 : vector<1x128x128xbf16> to vector<128x128xbf16>
    %c1 = arith.constant 1 : index
    %c0_6 = arith.constant 0 : index
    %c0_7 = arith.constant 0 : index
    %14 = vector.load %arg9[%c1, %c0_6, %c0_7] : memref<3x128x128xbf16, #tpu.memory_space<vmem>>, vector<1x128x128xbf16>
    %15 = vector.shape_cast %14 : vector<1x128x128xbf16> to vector<128x128xbf16>
    %c2 = arith.constant 2 : index
    %c0_8 = arith.constant 0 : index
    %c0_9 = arith.constant 0 : index
    %16 = vector.load %arg9[%c2, %c0_8, %c0_9] : memref<3x128x128xbf16, #tpu.memory_space<vmem>>, vector<1x128x128xbf16>
    %17 = vector.shape_cast %16 : vector<1x128x128xbf16> to vector<128x128xbf16>
    %c0_10 = arith.constant 0 : index
    %c0_11 = arith.constant 0 : index
    %c0_12 = arith.constant 0 : index
    %18 = vector.load %arg1[%c0_10, %c0_11, %c0_12] : memref<1x16x32xf32, #tpu.memory_space<vmem>>, vector<1x16x32xf32>
    %19 = vector.shape_cast %18 : vector<1x16x32xf32> to vector<16x32xf32>
    %20 = arith.truncf %19 : vector<16x32xf32> to vector<16x32xbf16>
    %c0_13 = arith.constant 0 : index
    %c0_14 = arith.constant 0 : index
    %21 = vector.load %arg8[%c0_13, %c0_14] : memref<32x128xbf16, #tpu.memory_space<vmem>>, vector<32x128xbf16>
    %cst = arith.constant dense<0.000000e+00> : vector<16x128xf32>
    %22 = tpu.matmul %20, %21, %cst {dimension_numbers = #tpu.dot_dimension_numbers<[1], [0], [0], [1], [0, 0, 1, 1], [], []>} : vector<16x32xbf16>, vector<32x128xbf16>, vector<16x128xf32> -> vector<16x128xf32>
    %23 = vector.broadcast %8 : vector<1x128xf32> to vector<16x128xf32>
    %24 = arith.addf %22, %23 : vector<16x128xf32>
    %cst_15 = arith.constant 0.000000e+00 : f32
    %25 = vector.broadcast %cst_15 : f32 to vector<16x128xf32>
    %26 = arith.maximumf %24, %25 : vector<16x128xf32>
    %27 = arith.truncf %26 : vector<16x128xf32> to vector<16x128xbf16>
    %cst_16 = arith.constant dense<0.000000e+00> : vector<16x128xf32>
    %28 = tpu.matmul %27, %17, %cst_16 {dimension_numbers = #tpu.dot_dimension_numbers<[1], [0], [0], [1], [0, 0, 1, 1], [], []>} : vector<16x128xbf16>, vector<128x128xbf16>, vector<16x128xf32> -> vector<16x128xf32>
    %29 = vector.broadcast %11 : vector<1x128xf32> to vector<16x128xf32>
    %30 = arith.addf %28, %29 : vector<16x128xf32>
    %31 = vector.shape_cast %30 : vector<16x128xf32> to vector<1x16x128xf32>
    %c0_17 = arith.constant 0 : index
    %c0_18 = arith.constant 0 : index
    %c0_19 = arith.constant 0 : index
    %32 = vector.load %arg3[%c0_17, %c0_18, %c0_19] : memref<1x8x32xf32, #tpu.memory_space<vmem>>, vector<1x8x32xf32>
    %33 = vector.shape_cast %32 : vector<1x8x32xf32> to vector<8x32xf32>
    %34 = arith.truncf %33 : vector<8x32xf32> to vector<8x32xbf16>
    %c0_20 = arith.constant 0 : index
    %c0_21 = arith.constant 0 : index
    %35 = vector.load %arg7[%c0_20, %c0_21] : memref<32x128xbf16, #tpu.memory_space<vmem>>, vector<32x128xbf16>
    %cst_22 = arith.constant dense<0.000000e+00> : vector<8x128xf32>
    %36 = tpu.matmul %34, %35, %cst_22 {dimension_numbers = #tpu.dot_dimension_numbers<[1], [0], [0], [1], [0, 0, 1, 1], [], []>} : vector<8x32xbf16>, vector<32x128xbf16>, vector<8x128xf32> -> vector<8x128xf32>
    %37 = vector.broadcast %7 : vector<1x128xf32> to vector<8x128xf32>
    %38 = arith.addf %36, %37 : vector<8x128xf32>
    %cst_23 = arith.constant 0.000000e+00 : f32
    %39 = vector.broadcast %cst_23 : f32 to vector<8x128xf32>
    %40 = arith.maximumf %38, %39 : vector<8x128xf32>
    %41 = arith.truncf %40 : vector<8x128xf32> to vector<8x128xbf16>
    %cst_24 = arith.constant dense<0.000000e+00> : vector<8x128xf32>
    %42 = tpu.matmul %41, %15, %cst_24 {dimension_numbers = #tpu.dot_dimension_numbers<[1], [0], [0], [1], [0, 0, 1, 1], [], []>} : vector<8x128xbf16>, vector<128x128xbf16>, vector<8x128xf32> -> vector<8x128xf32>
    %43 = vector.broadcast %10 : vector<1x128xf32> to vector<8x128xf32>
    %44 = arith.addf %42, %43 : vector<8x128xf32>
    %45 = vector.shape_cast %44 : vector<8x128xf32> to vector<1x8x128xf32>
    %46 = tpu.iota {dimensions = array<i32: 1>} : vector<80x16xi32>
    %c0_25 = arith.constant 0 : index
    %c0_26 = arith.constant 0 : index
    %c0_27 = arith.constant 0 : index
    %47 = vector.load %arg2[%c0_25, %c0_26, %c0_27] : memref<1x16x3xf32, #tpu.memory_space<vmem>>, vector<1x16x3xf32>
    %48 = vector.shape_cast %47 : vector<1x16x3xf32> to vector<16x3xf32>
    %c0_28 = arith.constant 0 : index
    %c0_29 = arith.constant 0 : index
    %c0_30 = arith.constant 0 : index
    %49 = vector.load %arg5[%c0_28, %c0_29, %c0_30] : memref<1x80x1xi32, #tpu.memory_space<vmem>>, vector<1x80x1xi32>
    %50 = vector.shape_cast %49 : vector<1x80x1xi32> to vector<80x1xi32>
    %51 = vector.broadcast %50 : vector<80x1xi32> to vector<80x16xi32>
    %52 = arith.cmpi eq, %46, %51 : vector<80x16xi32>
    %53 = arith.extui %52 : vector<80x16xi1> to vector<80x16xi32>
    %54 = arith.sitofp %53 : vector<80x16xi32> to vector<80x16xf32>
    %cst_31 = arith.constant dense<0.000000e+00> : vector<80x3xf32>
    %55 = tpu.matmul %54, %48, %cst_31 {dimension_numbers = #tpu.dot_dimension_numbers<[1], [0], [0], [1], [0, 0, 1, 1], [], []>} : vector<80x16xf32>, vector<16x3xf32>, vector<80x3xf32> -> vector<80x3xf32>
    %56 = vector.shape_cast %48 : vector<16x3xf32> to vector<1x16x3xf32>
    %57 = vector.shape_cast %56 : vector<1x16x3xf32> to vector<1x16x3xf32>
    %58 = vector.broadcast %57 : vector<1x16x3xf32> to vector<5x16x3xf32>
    %59 = vector.shape_cast %58 : vector<5x16x3xf32> to vector<80x3xf32>
    %60 = arith.subf %55, %59 : vector<80x3xf32>
    %61 = arith.mulf %60, %60 : vector<80x3xf32>
    %cst_32 = arith.constant dense<0.000000e+00> : vector<80xf32>
    %62 = vector.multi_reduction <add>, %61, %cst_32 [1] : vector<80x3xf32> to vector<80xf32>
    %63 = vector.shape_cast %62 : vector<80xf32> to vector<80x1xf32>
    %64 = math.sqrt %63 : vector<80x1xf32>
    %cst_33 = arith.constant dense<0.000000e+00> : vector<80x128xf32>
    %65 = tpu.matmul %55, %1, %cst_33 {dimension_numbers = #tpu.dot_dimension_numbers<[1], [0], [0], [1], [0, 0, 1, 1], [], []>} : vector<80x3xf32>, vector<3x128xf32>, vector<80x128xf32> -> vector<80x128xf32>
    %cst_34 = arith.constant dense<0.000000e+00> : vector<80x128xf32>
    %66 = tpu.matmul %59, %2, %cst_34 {dimension_numbers = #tpu.dot_dimension_numbers<[1], [0], [0], [1], [0, 0, 1, 1], [], []>} : vector<80x3xf32>, vector<3x128xf32>, vector<80x128xf32> -> vector<80x128xf32>
    %67 = arith.addf %65, %66 : vector<80x128xf32>
    %cst_35 = arith.constant dense<0.000000e+00> : vector<80x128xf32>
    %68 = tpu.matmul %60, %3, %cst_35 {dimension_numbers = #tpu.dot_dimension_numbers<[1], [0], [0], [1], [0, 0, 1, 1], [], []>} : vector<80x3xf32>, vector<3x128xf32>, vector<80x128xf32> -> vector<80x128xf32>
    %69 = arith.addf %67, %68 : vector<80x128xf32>
    %70 = vector.broadcast %64 : vector<80x1xf32> to vector<80x128xf32>
    %71 = vector.broadcast %4 : vector<1x128xf32> to vector<80x128xf32>
    %72 = arith.mulf %70, %71 : vector<80x128xf32>
    %73 = arith.addf %69, %72 : vector<80x128xf32>
    %74 = vector.broadcast %6 : vector<1x128xf32> to vector<80x128xf32>
    %75 = arith.addf %73, %74 : vector<80x128xf32>
    %cst_36 = arith.constant 0.000000e+00 : f32
    %76 = vector.broadcast %cst_36 : f32 to vector<80x128xf32>
    %77 = arith.maximumf %75, %76 : vector<80x128xf32>
    %78 = arith.truncf %77 : vector<80x128xf32> to vector<80x128xbf16>
    %cst_37 = arith.constant dense<0.000000e+00> : vector<80x128xf32>
    %79 = tpu.matmul %78, %13, %cst_37 {dimension_numbers = #tpu.dot_dimension_numbers<[1], [0], [0], [1], [0, 0, 1, 1], [], []>} : vector<80x128xbf16>, vector<128x128xbf16>, vector<80x128xf32> -> vector<80x128xf32>
    %80 = vector.broadcast %9 : vector<1x128xf32> to vector<80x128xf32>
    %81 = arith.addf %79, %80 : vector<80x128xf32>
    %82 = vector.shape_cast %31 : vector<1x16x128xf32> to vector<16x128xf32>
    %83 = vector.shape_cast %45 : vector<1x8x128xf32> to vector<8x128xf32>
    %cst_38 = arith.constant dense<0.000000e+00> : vector<16x8xf32>
    %84 = tpu.matmul %82, %83, %cst_38 {dimension_numbers = #tpu.dot_dimension_numbers<[1], [1], [0], [0], [0, 0, 1, 0], [], []>} : vector<16x128xf32>, vector<8x128xf32>, vector<16x8xf32> -> vector<16x8xf32>
    %cst_39 = arith.constant dense<0xFF800000> : vector<16xf32>
    %85 = vector.multi_reduction <maximumf>, %84, %cst_39 [1] : vector<16x8xf32> to vector<16xf32>
    %86 = vector.shape_cast %85 : vector<16xf32> to vector<16x1xf32>
    %87 = vector.broadcast %86 : vector<16x1xf32> to vector<16x8xf32>
    %88 = arith.subf %84, %87 : vector<16x8xf32>
    %89 = math.exp %88 : vector<16x8xf32>
    %cst_40 = arith.constant dense<0.000000e+00> : vector<16xf32>
    %90 = vector.multi_reduction <add>, %89, %cst_40 [1] : vector<16x8xf32> to vector<16xf32>
    %91 = vector.shape_cast %90 : vector<16xf32> to vector<16x1xf32>
    %92 = tpu.reciprocal %91 {approx = true} : vector<16x1xf32> -> vector<16x1xf32>
    %93 = vector.broadcast %92 : vector<16x1xf32> to vector<16x8xf32>
    %94 = arith.mulf %89, %93 : vector<16x8xf32>
    %c0_41 = arith.constant 0 : index
    %c0_42 = arith.constant 0 : index
    %c0_43 = arith.constant 0 : index
    %95 = vector.load %arg4[%c0_41, %c0_42, %c0_43] : memref<1x1x8xf32, #tpu.memory_space<vmem>>, vector<1x1x8xf32>
    %96 = vector.shape_cast %95 : vector<1x1x8xf32> to vector<1x8xf32>
    %97 = vector.broadcast %96 : vector<1x8xf32> to vector<16x8xf32>
    %98 = arith.mulf %94, %97 : vector<16x8xf32>
    %cst_44 = arith.constant dense<0.000000e+00> : vector<16xf32>
    %99 = vector.multi_reduction <add>, %98, %cst_44 [1] : vector<16x8xf32> to vector<16xf32>
    %100 = vector.shape_cast %99 : vector<16xf32> to vector<16x1xf32>
    %cst_45 = arith.constant 1.000000e-07 : f32
    %101 = vector.broadcast %cst_45 : f32 to vector<16x1xf32>
    %102 = arith.addf %100, %101 : vector<16x1xf32>
    %103 = tpu.reciprocal %102 {approx = true} : vector<16x1xf32> -> vector<16x1xf32>
    %104 = vector.broadcast %103 : vector<16x1xf32> to vector<16x8xf32>
    %105 = arith.mulf %98, %104 : vector<16x8xf32>
    %cst_46 = arith.constant dense<0.000000e+00> : vector<16x128xf32>
    %106 = tpu.matmul %105, %83, %cst_46 {dimension_numbers = #tpu.dot_dimension_numbers<[1], [0], [0], [1], [0, 0, 1, 1], [], []>} : vector<16x8xf32>, vector<8x128xf32>, vector<16x128xf32> -> vector<16x128xf32>
    %107 = arith.mulf %82, %106 : vector<16x128xf32>
    %cst_47 = arith.constant dense<0.000000e+00> : vector<80x128xf32>
    %108 = tpu.matmul %54, %107, %cst_47 {dimension_numbers = #tpu.dot_dimension_numbers<[1], [0], [0], [1], [0, 0, 1, 1], [], []>} : vector<80x16xf32>, vector<16x128xf32>, vector<80x128xf32> -> vector<80x128xf32>
    %109 = arith.mulf %108, %81 : vector<80x128xf32>
    %110 = vector.shape_cast %109 : vector<80x128xf32> to vector<5x16x128xf32>
    %cst_48 = arith.constant dense<0.000000e+00> : vector<16x128xf32>
    %111 = vector.multi_reduction <add>, %110, %cst_48 [0] : vector<5x16x128xf32> to vector<16x128xf32>
    %112 = arith.addf %111, %82 : vector<16x128xf32>
    %c0_49 = arith.constant 0 : index
    %c0_50 = arith.constant 0 : index
    %c0_51 = arith.constant 0 : index
    %113 = vector.load %arg11[%c0_49, %c0_50, %c0_51] : memref<1x16x128xf32, #tpu.memory_space<vmem>>, vector<1x16x128xf32>
    %114 = vector.shape_cast %113 : vector<1x16x128xf32> to vector<16x128xf32>
    %115 = vector.shape_cast %112 : vector<16x128xf32> to vector<1x16x128xf32>
    tpu.vector_store %arg11[%c0_49, %c0_50, %c0_51], %115 {strides = array<i32>} : memref<1x16x128xf32, #tpu.memory_space<vmem>>, vector<1x16x128xf32>,
    return
  }
  func.func @transform_0(%arg0: i32) -> (i32, i32, i32) {
    %c0_i32 = arith.constant 0 : i32
    %c0_i32_0 = arith.constant 0 : i32
    %c0_i32_1 = arith.constant 0 : i32
    return %arg0, %c0_i32, %c0_i32_0 : i32, i32, i32
  }
  func.func @transform_1(%arg0: i32) -> (i32, i32, i32) {
    %c0_i32 = arith.constant 0 : i32
    %c0_i32_0 = arith.constant 0 : i32
    %c0_i32_1 = arith.constant 0 : i32
    return %arg0, %c0_i32, %c0_i32_0 : i32, i32, i32
  }
  func.func @transform_2(%arg0: i32) -> (i32, i32, i32) {
    %c0_i32 = arith.constant 0 : i32
    %c0_i32_0 = arith.constant 0 : i32
    %c0_i32_1 = arith.constant 0 : i32
    return %arg0, %c0_i32, %c0_i32_0 : i32, i32, i32
  }
  func.func @transform_3(%arg0: i32) -> (i32, i32, i32) {
    %c0_i32 = arith.constant 0 : i32
    %c0_i32_0 = arith.constant 0 : i32
    %c0_i32_1 = arith.constant 0 : i32
    return %arg0, %c0_i32, %c0_i32_0 : i32, i32, i32
  }
  func.func @transform_4(%arg0: i32) -> (i32, i32, i32) {
    %c0_i32 = arith.constant 0 : i32
    %c0_i32_0 = arith.constant 0 : i32
    %c0_i32_1 = arith.constant 0 : i32
    return %arg0, %c0_i32, %c0_i32_0 : i32, i32, i32
  }
  func.func @transform_5(%arg0: i32) -> (i32, i32) {
    %c0_i32 = arith.constant 0 : i32
    %c0_i32_0 = arith.constant 0 : i32
    %c0_i32_1 = arith.constant 0 : i32
    return %c0_i32, %c0_i32_0 : i32, i32
  }
  func.func @transform_6(%arg0: i32) -> (i32, i32) {
    %c0_i32 = arith.constant 0 : i32
    %c0_i32_0 = arith.constant 0 : i32
    %c0_i32_1 = arith.constant 0 : i32
    return %c0_i32, %c0_i32_0 : i32, i32
  }
  func.func @transform_7(%arg0: i32) -> (i32, i32) {
    %c0_i32 = arith.constant 0 : i32
    %c0_i32_0 = arith.constant 0 : i32
    %c0_i32_1 = arith.constant 0 : i32
    return %c0_i32, %c0_i32_0 : i32, i32
  }
  func.func @transform_8(%arg0: i32) -> (i32, i32, i32) {
    %c0_i32 = arith.constant 0 : i32
    %c0_i32_0 = arith.constant 0 : i32
    %c0_i32_1 = arith.constant 0 : i32
    %c0_i32_2 = arith.constant 0 : i32
    return %c0_i32, %c0_i32_0, %c0_i32_1 : i32, i32, i32
  }
  func.func @transform_9(%arg0: i32) -> (i32, i32) {
    %c0_i32 = arith.constant 0 : i32
    %c0_i32_0 = arith.constant 0 : i32
    %c0_i32_1 = arith.constant 0 : i32
    return %c0_i32, %c0_i32_0 : i32, i32
  }
  func.func @transform_10(%arg0: i32) -> (i32, i32, i32) {
    %c0_i32 = arith.constant 0 : i32
    %c0_i32_0 = arith.constant 0 : i32
    %c0_i32_1 = arith.constant 0 : i32
    return %arg0, %c0_i32, %c0_i32_0 : i32, i32, i32
  }
}

</mosaic_0001>

<llo_original>
// kernel: tpu_custom_call.1
$region0: #{tpu_custom_call.1}
  #allocation0 [shape = 'u32[]', space=smem, size = 0x4, offset = 0x4, fixed_abs, tag = 'smem constant byte address 0x4 - core index']
  #allocation1 [shape = 'u32[72,128]{1,0:T(1,128)}', space=vmem, size = 0x9000, scoped, tag = 'internal scratch']
  %s0 = inlined_call_operand.hbm [shape: f32[2,16,32], index: 0, kind: input, shape index: {}]
  %s1 = inlined_call_operand.vmem [shape: f32[2,16,3], index: 1, kind: input, shape index: {}]
  %s2 = inlined_call_operand.hbm [shape: f32[2,8,32], index: 2, kind: input, shape index: {}]
  %s3 = inlined_call_operand.vmem [shape: f32[2,1,8], index: 3, kind: input, shape index: {}]
  %s4 = inlined_call_operand.vmem [shape: s32[2,80,1], index: 4, kind: input, shape index: {}]
  %s5 = inlined_call_operand.hbm [shape: f32[10,128], index: 5, kind: input, shape index: {}]
  %s6 = inlined_call_operand.hbm [shape: bf16[32,128], index: 6, kind: input, shape index: {}]
  %s7 = inlined_call_operand.hbm [shape: bf16[32,128], index: 7, kind: input, shape index: {}]
  %s8 = inlined_call_operand.vmem [shape: bf16[3,128,128], index: 8, kind: input, shape index: {}]
  %s9 = inlined_call_operand.vmem [shape: f32[6,128], index: 9, kind: input, shape index: {}]
  %s10 = inlined_call_operand.hbm [shape: f32[2,16,128], index: 10, kind: output, shape index: {}]
  %s11 = sld [smem:[#allocation0]]
  $region93: #{tpu_custom_call.1} parent=0
    _
  %s13 = ssub.s32 1, %s11
  %s14 = scalar_select 0, %s13, %s11
  $region1: #{tpu_custom_call.1} parent=0
    #allocation2 [shape = 'u8[16384]{0}', space=vmem, size = 0x4000, scoped, tag = 'input window, operand 0']
    #allocation3 [shape = 's32[2]{0}', space=sflag, size = 0x8, scoped, tag = 'scoped memory for tpu_custom_call.1']
    #allocation4 [shape = 's32[2]{0}', space=sflag, size = 0x8, scoped, tag = 'scoped memory for tpu_custom_call.1']
    #allocation5 [shape = 'u8[8192]{0}', space=vmem, size = 0x2000, scoped, tag = 'input window, operand 2']
    #allocation6 [shape = 's32[2]{0}', space=sflag, size = 0x8, scoped, tag = 'scoped memory for tpu_custom_call.1']
    #allocation7 [shape = 'u8[8192]{0}', space=vmem, size = 0x2000, scoped, tag = 'input window, operand 5, single buffered']
    #allocation8 [shape = 'u8[8192]{0}', space=vmem, size = 0x2000, scoped, tag = 'input window, operand 6, single buffered']
    #allocation9 [shape = 's32[1]{0}', space=sflag, size = 0x4, scoped, tag = 'scoped memory for tpu_custom_call.1']
    #allocation10 [shape = 'u8[8192]{0}', space=vmem, size = 0x2000, scoped, tag = 'input window, operand 7, single buffered']
    #allocation11 [shape = 'u8[16384]{0}', space=vmem, size = 0x4000, scoped, tag = 'output window, operand 0']
    %15 = vsyncpa [#allocation3], 0
    %s16 = scalar_lea.sflag [#allocation3], 1
    %17 = vsyncpa %s16, 0
    %18 = vsyncpa [#allocation6], 0
    %s19 = scalar_lea.sflag [#allocation6], 1
    %20 = vsyncpa %s19, 0
    %21 = vsyncpa [#allocation9], 0
    %22 = vsyncpa [#allocation4], 0
    %s23 = scalar_lea.sflag [#allocation4], 1
    %24 = vsyncpa %s23, 0
    loop: start=0, step=1, limit=4
    $region2: #{tpu_custom_call.1} parent=1 // loop_pre_header
      _
    $region3: #{tpu_custom_call.1} parent=1 // loop_header
      %s26 = sphi 0, %s30
      %p27 = scmp.ge.s32.totalorder %s26, 4
      %s36 = sphi 0, %s38
      %s39 = sphi 0, %s36
      %s40 = sphi 0, %s39
      %s56 = sphi 0, %s40
      %s62 = sphi 0, %s64
      %s65 = sphi 0, %s62
      %s66 = sphi 0, %s65
      %s82 = sphi 0, %s66
      %s88 = sphi 0, %s90
      %s91 = sphi 0, %s88
      %s92 = sphi 0, %s91
      %s108 = sphi 0, %s92
      %s114 = sphi 0, %s116
      %s117 = sphi 0, %s114
      %s118 = sphi 0, %s117
      %s134 = sphi 0, %s118
      %s140 = sphi 0, %s142
      %s143 = sphi 0, %s140
      %s144 = sphi 0, %s143
      %s160 = sphi 0, %s144
      %s164 = sphi 0, %s164
      %s166 = sphi 0, %s164
      %s167 = sphi 0, %s166
      %s181 = sphi 0, %s167
      %s185 = sphi 0, %s185
      %s187 = sphi 0, %s185
      %s188 = sphi 0, %s187
      %s202 = sphi 0, %s188
      %s206 = sphi 0, %s206
      %s208 = sphi 0, %s206
      %s209 = sphi 0, %s208
      %s223 = sphi 0, %s209
      %s227 = sphi 0, %s227
      %s229 = sphi 0, %s227
      %s230 = sphi 0, %s229
      %s244 = sphi 0, %s230
      %s248 = sphi 0, %s248
      %s250 = sphi 0, %s248
      %s251 = sphi 0, %s250
      %s265 = sphi 0, %s251
      %s271 = sphi 0, %s273
      %s274 = sphi 0, %s271
      %s275 = sphi 0, %s274
      %s291 = sphi 0, %s275
    $region4: #{tpu_custom_call.1} parent=1 // loop_header_branch
      %29 = sbr.rel (%p27) target = $region8
    $region5: #{tpu_custom_call.1} parent=1 // loop_body
      %s31 = ssub.s32 %s26, 1
      %s32 = ssub.s32 %s26, 2
      %s33 = sadd.s32 %s26, 1
      %s34 = ssub.s32 %s26, %s33
      %p35 = scmp.eq.s32.totalorder %s34, 0
      %s37 = sadd.s32 %s36, 1
      %s38 = scalar_select %p35, %s36, %s37
      %p41 = pneg %p35
      %p42 = scmp.eq.s32.totalorder %s26, 1
      %p43 = por %p41, %p42
      %p44 = scmp.ne.s32.totalorder %s36, %s39
      %p45 = scmp.eq.s32.totalorder %s26, 0
      %p46 = por %p44, %p45
      %p47 = scmp.ne.s32.totalorder %s36, %s39
      %p48 = scmp.eq.s32.totalorder %s31, 1
      %p49 = por %p47, %p48
      %p50 = scmp.ne.s32.totalorder %s39, %s40
      %p51 = scmp.eq.s32.totalorder %s31, 0
      %p52 = por %p50, %p51
      %p53 = scmp.ne.s32.totalorder %s39, %s40
      %p54 = scmp.eq.s32.totalorder %s32, 1
      %p55 = por %p53, %p54
      %p57 = scmp.ne.s32.totalorder %s40, %s56
      %p58 = scmp.eq.s32.totalorder %s32, 0
      %p59 = por %p57, %p58
      %s60 = ssub.s32 %s26, %s33
      %p61 = scmp.eq.s32.totalorder %s60, 0
      %s63 = sadd.s32 %s62, 1
      %s64 = scalar_select %p61, %s62, %s63
      %p67 = pneg %p61
      %p68 = scmp.eq.s32.totalorder %s26, 1
      %p69 = por %p67, %p68
      %p70 = scmp.ne.s32.totalorder %s62, %s65
      %p71 = scmp.eq.s32.totalorder %s26, 0
      %p72 = por %p70, %p71
      %p73 = scmp.ne.s32.totalorder %s62, %s65
      %p74 = scmp.eq.s32.totalorder %s31, 1
      %p75 = por %p73, %p74
      %p76 = scmp.ne.s32.totalorder %s65, %s66
      %p77 = scmp.eq.s32.totalorder %s31, 0
      %p78 = por %p76, %p77
      %p79 = scmp.ne.s32.totalorder %s65, %s66
      %p80 = scmp.eq.s32.totalorder %s32, 1
      %p81 = por %p79, %p80
      %p83 = scmp.ne.s32.totalorder %s66, %s82
      %p84 = scmp.eq.s32.totalorder %s32, 0
      %p85 = por %p83, %p84
      %s86 = ssub.s32 %s26, %s33
      %p87 = scmp.eq.s32.totalorder %s86, 0
      %s89 = sadd.s32 %s88, 1
      %s90 = scalar_select %p87, %s88, %s89
      %p93 = pneg %p87
      %p94 = scmp.eq.s32.totalorder %s26, 1
      %p95 = por %p93, %p94
      %p96 = scmp.ne.s32.totalorder %s88, %s91
      %p97 = scmp.eq.s32.totalorder %s26, 0
      %p98 = por %p96, %p97
      %p99 = scmp.ne.s32.totalorder %s88, %s91
      %p100 = scmp.eq.s32.totalorder %s31, 1
      %p101 = por %p99, %p100
      %p102 = scmp.ne.s32.totalorder %s91, %s92
      %p103 = scmp.eq.s32.totalorder %s31, 0
      %p104 = por %p102, %p103
      %p105 = scmp.ne.s32.totalorder %s91, %s92
      %p106 = scmp.eq.s32.totalorder %s32, 1
      %p107 = por %p105, %p106
      %p109 = scmp.ne.s32.totalorder %s92, %s108
      %p110 = scmp.eq.s32.totalorder %s32, 0
      %p111 = por %p109, %p110
      %s112 = ssub.s32 %s26, %s33
      %p113 = scmp.eq.s32.totalorder %s112, 0
      %s115 = sadd.s32 %s114, 1
      %s116 = scalar_select %p113, %s114, %s115
      %p119 = pneg %p113
      %p120 = scmp.eq.s32.totalorder %s26, 1
      %p121 = por %p119, %p120
      %p122 = scmp.ne.s32.totalorder %s114, %s117
      %p123 = scmp.eq.s32.totalorder %s26, 0
      %p124 = por %p122, %p123
      %p125 = scmp.ne.s32.totalorder %s114, %s117
      %p126 = scmp.eq.s32.totalorder %s31, 1
      %p127 = por %p125, %p126
      %p128 = scmp.ne.s32.totalorder %s117, %s118
      %p129 = scmp.eq.s32.totalorder %s31, 0
      %p130 = por %p128, %p129
      %p131 = scmp.ne.s32.totalorder %s117, %s118
      %p132 = scmp.eq.s32.totalorder %s32, 1
      %p133 = por %p131, %p132
      %p135 = scmp.ne.s32.totalorder %s118, %s134
      %p136 = scmp.eq.s32.totalorder %s32, 0
      %p137 = por %p135, %p136
      %s138 = ssub.s32 %s26, %s33
      %p139 = scmp.eq.s32.totalorder %s138, 0
      %s141 = sadd.s32 %s140, 1
      %s142 = scalar_select %p139, %s140, %s141
      %p145 = pneg %p139
      %p146 = scmp.eq.s32.totalorder %s26, 1
      %p147 = por %p145, %p146
      %p148 = scmp.ne.s32.totalorder %s140, %s143
      %p149 = scmp.eq.s32.totalorder %s26, 0
      %p150 = por %p148, %p149
      %p151 = scmp.ne.s32.totalorder %s140, %s143
      %p152 = scmp.eq.s32.totalorder %s31, 1
      %p153 = por %p151, %p152
      %p154 = scmp.ne.s32.totalorder %s143, %s144
      %p155 = scmp.eq.s32.totalorder %s31, 0
      %p156 = por %p154, %p155
      %p157 = scmp.ne.s32.totalorder %s143, %s144
      %p158 = scmp.eq.s32.totalorder %s32, 1
      %p159 = por %p157, %p158
      %p161 = scmp.ne.s32.totalorder %s144, %s160
      %p162 = scmp.eq.s32.totalorder %s32, 0
      %p163 = por %p161, %p162
      %s165 = sadd.s32 %s164, 1
      %p168 = scmp.eq.s32.totalorder %s26, 1
      %p169 = scmp.ne.s32.totalorder %s164, %s166
      %p170 = scmp.eq.s32.totalorder %s26, 0
      %p171 = por %p169, %p170
      %p172 = scmp.ne.s32.totalorder %s164, %s166
      %p173 = scmp.eq.s32.totalorder %s31, 1
      %p174 = por %p172, %p173
      %p175 = scmp.ne.s32.totalorder %s166, %s167
      %p176 = scmp.eq.s32.totalorder %s31, 0
      %p177 = por %p175, %p176
      %p178 = scmp.ne.s32.totalorder %s166, %s167
      %p179 = scmp.eq.s32.totalorder %s32, 1
      %p180 = por %p178, %p179
      %p182 = scmp.ne.s32.totalorder %s167, %s181
      %p183 = scmp.eq.s32.totalorder %s32, 0
      %p184 = por %p182, %p183
      %s186 = sadd.s32 %s185, 1
      %p189 = scmp.eq.s32.totalorder %s26, 1
      %p190 = scmp.ne.s32.totalorder %s185, %s187
      %p191 = scmp.eq.s32.totalorder %s26, 0
      %p192 = por %p190, %p191
      %p193 = scmp.ne.s32.totalorder %s185, %s187
      %p194 = scmp.eq.s32.totalorder %s31, 1
      %p195 = por %p193, %p194
      %p196 = scmp.ne.s32.totalorder %s187, %s188
      %p197 = scmp.eq.s32.totalorder %s31, 0
      %p198 = por %p196, %p197
      %p199 = scmp.ne.s32.totalorder %s187, %s188
      %p200 = scmp.eq.s32.totalorder %s32, 1
      %p201 = por %p199, %p200
      %p203 = scmp.ne.s32.totalorder %s188, %s202
      %p204 = scmp.eq.s32.totalorder %s32, 0
      %p205 = por %p203, %p204
      %s207 = sadd.s32 %s206, 1
      %p210 = scmp.eq.s32.totalorder %s26, 1
      %p211 = scmp.ne.s32.totalorder %s206, %s208
      %p212 = scmp.eq.s32.totalorder %s26, 0
      %p213 = por %p211, %p212
      %p214 = scmp.ne.s32.totalorder %s206, %s208
      %p215 = scmp.eq.s32.totalorder %s31, 1
      %p216 = por %p214, %p215
      %p217 = scmp.ne.s32.totalorder %s208, %s209
      %p218 = scmp.eq.s32.totalorder %s31, 0
      %p219 = por %p217, %p218
      %p220 = scmp.ne.s32.totalorder %s208, %s209
      %p221 = scmp.eq.s32.totalorder %s32, 1
      %p222 = por %p220, %p221
      %p224 = scmp.ne.s32.totalorder %s209, %s223
      %p225 = scmp.eq.s32.totalorder %s32, 0
      %p226 = por %p224, %p225
      %s228 = sadd.s32 %s227, 1
      %p231 = scmp.eq.s32.totalorder %s26, 1
      %p232 = scmp.ne.s32.totalorder %s227, %s229
      %p233 = scmp.eq.s32.totalorder %s26, 0
      %p234 = por %p232, %p233
      %p235 = scmp.ne.s32.totalorder %s227, %s229
      %p236 = scmp.eq.s32.totalorder %s31, 1
      %p237 = por %p235, %p236
      %p238 = scmp.ne.s32.totalorder %s229, %s230
      %p239 = scmp.eq.s32.totalorder %s31, 0
      %p240 = por %p238, %p239
      %p241 = scmp.ne.s32.totalorder %s229, %s230
      %p242 = scmp.eq.s32.totalorder %s32, 1
      %p243 = por %p241, %p242
      %p245 = scmp.ne.s32.totalorder %s230, %s244
      %p246 = scmp.eq.s32.totalorder %s32, 0
      %p247 = por %p245, %p246
      %s249 = sadd.s32 %s248, 1
      %p252 = scmp.eq.s32.totalorder %s26, 1
      %p253 = scmp.ne.s32.totalorder %s248, %s250
      %p254 = scmp.eq.s32.totalorder %s26, 0
      %p255 = por %p253, %p254
      %p256 = scmp.ne.s32.totalorder %s248, %s250
      %p257 = scmp.eq.s32.totalorder %s31, 1
      %p258 = por %p256, %p257
      %p259 = scmp.ne.s32.totalorder %s250, %s251
      %p260 = scmp.eq.s32.totalorder %s31, 0
      %p261 = por %p259, %p260
      %p262 = scmp.ne.s32.totalorder %s250, %s251
      %p263 = scmp.eq.s32.totalorder %s32, 1
      %p264 = por %p262, %p263
      %p266 = scmp.ne.s32.totalorder %s251, %s265
      %p267 = scmp.eq.s32.totalorder %s32, 0
      %p268 = por %p266, %p267
      %s269 = ssub.s32 %s26, %s33
      %p270 = scmp.eq.s32.totalorder %s269, 0
      %s272 = sadd.s32 %s271, 1
      %s273 = scalar_select %p270, %s271, %s272
      %p276 = pneg %p270
      %p277 = scmp.eq.s32.totalorder %s26, 1
      %p278 = por %p276, %p277
      %p279 = scmp.ne.s32.totalorder %s271, %s274
      %p280 = scmp.eq.s32.totalorder %s26, 0
      %p281 = por %p279, %p280
      %p282 = scmp.ne.s32.totalorder %s271, %s274
      %p283 = scmp.eq.s32.totalorder %s31, 1
      %p284 = por %p282, %p283
      %p285 = scmp.ne.s32.totalorder %s274, %s275
      %p286 = scmp.eq.s32.totalorder %s31, 0
      %p287 = por %p285, %p286
      %p288 = scmp.ne.s32.totalorder %s274, %s275
      %p289 = scmp.eq.s32.totalorder %s32, 1
      %p290 = por %p288, %p289
      %p292 = scmp.ne.s32.totalorder %s275, %s291
      %p293 = scmp.eq.s32.totalorder %s32, 0
      %p294 = por %p292, %p293
      %p295 = scmp.le.s32.totalorder 1, %s26
      %p296 = scmp.lt.s32.totalorder %s26, 3
      %p297 = pnand %p295, %p296
      %p298 = pneg %p297
      // Predicated region
      $region9: #{tpu_custom_call.1} parent=5 // pred_check
        _
      $region10: #{tpu_custom_call.1} parent=5 // pred_check_branch
        %300 = sbr.rel (%p297) target = $region12
      $region11: #{tpu_custom_call.1} parent=5 // pred_region
        %s301 = ssub.s32 %s26, 1
        // Predicated region
        $region13: #{tpu_custom_call.1} parent=11 // pred_check
          %p302 = pneg %p177
        $region14: #{tpu_custom_call.1} parent=11 // pred_check_branch
          %304 = sbr.rel (%p302) target = $region16
        $region15: #{tpu_custom_call.1} parent=11 // pred_region
          %306 = vsyncadd [#allocation6], 0
          %s307 = sshll.u32 %s5, 4
          %s308 = int_to_ptr.hbm [resolvable:$true] %s307
          %s309 = sshll.u32 [#allocation7], 4
          %s310 = int_to_ptr.vmem [resolvable:$true] %s309
          %315 = dma.hbm_to_vmem [thread:$0]  %s308, 256, %s310, [#allocation6], 128, 128, 8
        $region16: #{tpu_custom_call.1} parent=11 // pred_fallthru
          _
        // Predicated region
        $region17: #{tpu_custom_call.1} parent=11 // pred_check
          %p316 = pneg %p198
        $region18: #{tpu_custom_call.1} parent=11 // pred_check_branch
          %318 = sbr.rel (%p316) target = $region20
        $region19: #{tpu_custom_call.1} parent=11 // pred_region
          %320 = vsyncadd [#allocation9], 0
          %s321 = sshll.u32 %s6, 4
          %s322 = int_to_ptr.hbm [resolvable:$true] %s321
          %s323 = sshll.u32 [#allocation8], 4
          %s324 = int_to_ptr.vmem [resolvable:$true] %s323
          %329 = dma.hbm_to_vmem [thread:$0]  %s322, 256, %s324, [#allocation9], 64, 64, 4
        $region20: #{tpu_custom_call.1} parent=11 // pred_fallthru
          _
        // Predicated region
        $region21: #{tpu_custom_call.1} parent=11 // pred_check
          %p330 = pneg %p219
        $region22: #{tpu_custom_call.1} parent=11 // pred_check_branch
          %332 = sbr.rel (%p330) target = $region24
        $region23: #{tpu_custom_call.1} parent=11 // pred_region
          %334 = vsyncadd [#allocation9], 0
          %s335 = sshll.u32 %s7, 4
          %s336 = int_to_ptr.hbm [resolvable:$true] %s335
          %s337 = sshll.u32 [#allocation10], 4
          %s338 = int_to_ptr.vmem [resolvable:$true] %s337
          %343 = dma.hbm_to_vmem [thread:$0]  %s336, 256, %s338, [#allocation9], 64, 64, 4
        $region24: #{tpu_custom_call.1} parent=11 // pred_fallthru
          _
        // Predicated region
        $region25: #{tpu_custom_call.1} parent=11 // pred_check
          %p344 = pneg %p240
        $region26: #{tpu_custom_call.1} parent=11 // pred_check_branch
          %346 = sbr.rel (%p344) target = $region28
        $region27: #{tpu_custom_call.1} parent=11 // pred_region
          _
        $region28: #{tpu_custom_call.1} parent=11 // pred_fallthru
          _
        // Predicated region
        $region29: #{tpu_custom_call.1} parent=11 // pred_check
          %p347 = pneg %p261
        $region30: #{tpu_custom_call.1} parent=11 // pred_check_branch
          %349 = sbr.rel (%p347) target = $region32
        $region31: #{tpu_custom_call.1} parent=11 // pred_region
          _
        $region32: #{tpu_custom_call.1} parent=11 // pred_fallthru
          _
      $region12: #{tpu_custom_call.1} parent=5 // pred_fallthru
        _
      %p350 = scmp.lt.s32.totalorder %s26, 2
      // Predicated region
      $region33: #{tpu_custom_call.1} parent=5 // pred_check
        %p351 = pneg %p350
      $region34: #{tpu_custom_call.1} parent=5 // pred_check_branch
        %353 = sbr.rel (%p351) target = $region36
      $region35: #{tpu_custom_call.1} parent=5 // pred_region
        // Predicated region
        $region37: #{tpu_custom_call.1} parent=35 // pred_check
          %p354 = pneg %p46
        $region38: #{tpu_custom_call.1} parent=35 // pred_check_branch
          %356 = sbr.rel (%p354) target = $region40
        $region39: #{tpu_custom_call.1} parent=35 // pred_region
          %s357 = sand.u32 %s36, 1
          %s358 = scalar_lea.sflag [#allocation3], %s357
          %s359 = sand.u32 %s36, 1
          %s360 = smul.addr %s359, 16
          %s361 = scalar_lea.vmem [#allocation2], %s360
          %363 = vsyncadd %s358, 0
          %s364 = smul.addr %s26, 2
          %s365 = smul.addr %s364, 8
          %s366 = scalar_lea.hbm %s0, %s365
          %s367 = sshll.u32 %s366, 4
          %s368 = int_to_ptr.hbm [resolvable:$true] %s367
          %s369 = sshll.u32 %s361, 4
          %s370 = int_to_ptr.vmem [resolvable:$true] %s369
          %375 = dma.hbm_to_vmem [thread:$0]  %s368, 256, %s370, %s358, 128, 128, 8
        $region40: #{tpu_custom_call.1} parent=35 // pred_fallthru
          _
        // Predicated region
        $region41: #{tpu_custom_call.1} parent=35 // pred_check
          %p376 = pneg %p72
        $region42: #{tpu_custom_call.1} parent=35 // pred_check_branch
          %378 = sbr.rel (%p376) target = $region44
        $region43: #{tpu_custom_call.1} parent=35 // pred_region
          %p379 = scmp.lt.s32.totalorder %s26, 1
          %s380 = scalar_select %p379, %s26, 1
          %s381 = smul.addr %s380, 2
          %s382 = smul.addr %s381, 8
          %s383 = scalar_lea.vmem %s1, %s382
        $region44: #{tpu_custom_call.1} parent=35 // pred_fallthru
          _
        // Predicated region
        $region45: #{tpu_custom_call.1} parent=35 // pred_check
          %p384 = pneg %p98
        $region46: #{tpu_custom_call.1} parent=35 // pred_check_branch
          %386 = sbr.rel (%p384) target = $region48
        $region47: #{tpu_custom_call.1} parent=35 // pred_region
          %s387 = sand.u32 %s26, 1
          %s388 = scalar_lea.sflag [#allocation6], %s387
          %s389 = sand.u32 %s88, 1
          %s390 = smul.addr %s389, 8
          %s391 = scalar_lea.vmem [#allocation5], %s390
          %393 = vsyncadd %s388, 0
          %s394 = smul.addr %s26, 8
          %s395 = scalar_lea.hbm %s2, %s394
          %s397 = sshll.u32 %s395, 4
          %s398 = int_to_ptr.hbm [resolvable:$true] %s397
          %s399 = sshll.u32 %s391, 4
          %s400 = int_to_ptr.vmem [resolvable:$true] %s399
          %402 = dma.hbm_to_vmem [thread:$0]  %s398, 128, %s400, %s388
        $region48: #{tpu_custom_call.1} parent=35 // pred_fallthru
          _
        // Predicated region
        $region49: #{tpu_custom_call.1} parent=35 // pred_check
          %p403 = pneg %p124
        $region50: #{tpu_custom_call.1} parent=35 // pred_check_branch
          %405 = sbr.rel (%p403) target = $region52
        $region51: #{tpu_custom_call.1} parent=35 // pred_region
          %p406 = scmp.lt.s32.totalorder %s26, 1
          %s407 = scalar_select %p406, %s26, 1
          %s408 = scalar_lea.vmem %s3, %s407
        $region52: #{tpu_custom_call.1} parent=35 // pred_fallthru
          _
        // Predicated region
        $region53: #{tpu_custom_call.1} parent=35 // pred_check
          %p409 = pneg %p150
        $region54: #{tpu_custom_call.1} parent=35 // pred_check_branch
          %411 = sbr.rel (%p409) target = $region56
        $region55: #{tpu_custom_call.1} parent=35 // pred_region
          %p412 = scmp.lt.s32.totalorder %s26, 1
          %s413 = scalar_select %p412, %s26, 1
          %s414 = smul.addr %s413, 10
          %s415 = smul.addr %s414, 8
          %s416 = scalar_lea.vmem %s4, %s415
        $region56: #{tpu_custom_call.1} parent=35 // pred_fallthru
          _
      $region36: #{tpu_custom_call.1} parent=5 // pred_fallthru
        _
      %p417 = scmp.le.s32.totalorder 1, %s26
      %p418 = scmp.lt.s32.totalorder %s26, 3
      %p419 = pnand %p417, %p418
      %p420 = pneg %p419
      // Predicated region
      $region57: #{tpu_custom_call.1} parent=5 // pred_check
        _
      $region58: #{tpu_custom_call.1} parent=5 // pred_check_branch
        %422 = sbr.rel (%p419) target = $region60
      $region59: #{tpu_custom_call.1} parent=5 // pred_region
        %s423 = ssub.s32 %s26, 1
        %s424 = sand.u32 %s39, 1
        %s425 = scalar_lea.sflag [#allocation3], %s424
        %s426 = sand.u32 %s39, 1
        %s427 = smul.addr %s426, 16
        %s428 = scalar_lea.vmem [#allocation2], %s427
        // Predicated region
        $region61: #{tpu_custom_call.1} parent=59 // pred_check
          %p429 = pneg %p52
        $region62: #{tpu_custom_call.1} parent=59 // pred_check_branch
          %431 = sbr.rel (%p429) target = $region64
        $region63: #{tpu_custom_call.1} parent=59 // pred_region
          %433 = dma.done %s425, 256
        $region64: #{tpu_custom_call.1} parent=59 // pred_fallthru
          _
        %s434 = sand.u32 %s31, 1
        %s435 = scalar_lea.sflag [#allocation6], %s434
        %s436 = sand.u32 %s91, 1
        %s437 = smul.addr %s436, 8
        %s438 = scalar_lea.vmem [#allocation5], %s437
        // Predicated region
        $region65: #{tpu_custom_call.1} parent=59 // pred_check
          %p439 = pneg %p104
        $region66: #{tpu_custom_call.1} parent=59 // pred_check_branch
          %441 = sbr.rel (%p439) target = $region68
        $region67: #{tpu_custom_call.1} parent=59 // pred_region
          %443 = dma.done %s435, 128
        $region68: #{tpu_custom_call.1} parent=59 // pred_fallthru
          _
        // Predicated region
        $region69: #{tpu_custom_call.1} parent=59 // pred_check
          %p444 = pneg %p177
        $region70: #{tpu_custom_call.1} parent=59 // pred_check_branch
          %446 = sbr.rel (%p444) target = $region72
        $region71: #{tpu_custom_call.1} parent=59 // pred_region
          %448 = dma.done [#allocation6], 256
        $region72: #{tpu_custom_call.1} parent=59 // pred_fallthru
          _
        // Predicated region
        $region73: #{tpu_custom_call.1} parent=59 // pred_check
          %p449 = pneg %p198
        $region74: #{tpu_custom_call.1} parent=59 // pred_check_branch
          %451 = sbr.rel (%p449) target = $region76
        $region75: #{tpu_custom_call.1} parent=59 // pred_region
          %453 = dma.done [#allocation9], 256
        $region76: #{tpu_custom_call.1} parent=59 // pred_fallthru
          _
        // Predicated region
        $region77: #{tpu_custom_call.1} parent=59 // pred_check
          %p454 = pneg %p219
        $region78: #{tpu_custom_call.1} parent=59 // pred_check_branch
          %456 = sbr.rel (%p454) target = $region80
        $region79: #{tpu_custom_call.1} parent=59 // pred_region
          %458 = dma.done [#allocation9], 256
        $region80: #{tpu_custom_call.1} parent=59 // pred_fallthru
          _
        %s459 = sand.u32 %s39, 1
        %s460 = scalar_lea.sflag [#allocation3], %s459
        %s461 = sand.u32 %s39, 1
        %s462 = smul.addr %s461, 16
        %s463 = scalar_lea.vmem [#allocation2], %s462
        %p464 = pneg %p52
        %p465 = pneg %p49
        %p466 = scmp.lt.s32.totalorder %s31, 1
        %s467 = scalar_select %p466, %s31, 1
        %s468 = smul.addr %s467, 2
        %s469 = smul.addr %s468, 8
        %s470 = scalar_lea.vmem %s1, %s469
        %p471 = pneg %p78
        %p472 = pneg %p75
        %s473 = sand.u32 %s31, 1
        %s474 = scalar_lea.sflag [#allocation6], %s473
        %s475 = sand.u32 %s91, 1
        %s476 = smul.addr %s475, 8
        %s477 = scalar_lea.vmem [#allocation5], %s476
        %p478 = pneg %p104
        %p479 = pneg %p101
        %p480 = scmp.lt.s32.totalorder %s31, 1
        %s481 = scalar_select %p480, %s31, 1
        %s482 = scalar_lea.vmem %s3, %s481
        %p483 = pneg %p130
        %p484 = pneg %p127
        %p485 = scmp.lt.s32.totalorder %s31, 1
        %s486 = scalar_select %p485, %s31, 1
        %s487 = smul.addr %s486, 10
        %s488 = smul.addr %s487, 8
        %s489 = scalar_lea.vmem %s4, %s488
        %p490 = pneg %p156
        %p491 = pneg %p153
        %p492 = pneg %p177
        %p493 = pneg %p174
        %p494 = pneg %p198
        %p495 = pneg %p195
        %p496 = pneg %p219
        %p497 = pneg %p216
        %p498 = pneg %p240
        %p499 = pneg %p237
        %p500 = pneg %p261
        %p501 = pneg %p258
        %p502 = pneg %p287
        %p503 = pneg %p284
        %s504 = sand.u32 %s274, 1
        %s505 = scalar_lea.sflag [#allocation4], %s504
        %s506 = sand.u32 %s274, 1
        %s507 = smul.addr %s506, 16
        %s508 = scalar_lea.vmem [#allocation11], %s507
        %p509 = scmp.lt.s32.totalorder %s31, 1
        %s510 = scalar_select %p509, %s31, 1
        %s511 = smul.addr %s510, 2
        %s512 = smul.addr %s511, 8
        %s513 = scalar_lea.vmem %s1, %s512
        %p514 = scmp.lt.s32.totalorder %s31, 1
        %s515 = scalar_select %p514, %s31, 1
        %s516 = scalar_lea.vmem %s3, %s515
        %p517 = scmp.lt.s32.totalorder %s31, 1
        %s518 = scalar_select %p517, %s31, 1
        %s519 = smul.addr %s518, 10
        %s520 = smul.addr %s519, 8
        %s521 = scalar_lea.vmem %s4, %s520
        %v523 = vld [vmem:[#allocation7] sm:$0xff]
        %v524 = vld [vmem:[#allocation7 + $0x8] sm:$0x3]
        %v525 = vld [vmem:[%s9] sm:$0x3f]
        %v526 = vld [vmem:[%s8] sm:$0xf]
        %v527 = vld [vmem:[%s8 + $0x4] sm:$0xf]
        %v528 = vld [vmem:[%s8 + $0x8] sm:$0xf]
        %v529 = vld [vmem:[%s8 + $0xc] sm:$0xf]
        %v530 = vld [vmem:[%s8 + $0x10] sm:$0xf]
        %v531 = vld [vmem:[%s8 + $0x14] sm:$0xf]
        %v532 = vld [vmem:[%s8 + $0x18] sm:$0xf]
        %v533 = vld [vmem:[%s8 + $0x1c] sm:$0xf]
        %v534 = vld [vmem:[%s8 + $0x20] sm:$0xf]
        %v535 = vld [vmem:[%s8 + $0x24] sm:$0xf]
        %v536 = vld [vmem:[%s8 + $0x28] sm:$0xf]
        %v537 = vld [vmem:[%s8 + $0x2c] sm:$0xf]
        %v538 = vld [vmem:[%s8 + $0x30] sm:$0xf]
        %v539 = vld [vmem:[%s8 + $0x34] sm:$0xf]
        %v540 = vld [vmem:[%s8 + $0x38] sm:$0xf]
        %v541 = vld [vmem:[%s8 + $0x3c] sm:$0xf]
        %s542 = scalar_lea.vmem %s8, 64
        %v543 = vld [vmem:[%s542] sm:$0xf]
        %v544 = vld [vmem:[%s542 + $0x4] sm:$0xf]
        %v545 = vld [vmem:[%s542 + $0x8] sm:$0xf]
        %v546 = vld [vmem:[%s542 + $0xc] sm:$0xf]
        %v547 = vld [vmem:[%s542 + $0x10] sm:$0xf]
        %v548 = vld [vmem:[%s542 + $0x14] sm:$0xf]
        %v549 = vld [vmem:[%s542 + $0x18] sm:$0xf]
        %v550 = vld [vmem:[%s542 + $0x1c] sm:$0xf]
        %v551 = vld [vmem:[%s542 + $0x20] sm:$0xf]
        %v552 = vld [vmem:[%s542 + $0x24] sm:$0xf]
        %v553 = vld [vmem:[%s542 + $0x28] sm:$0xf]
        %v554 = vld [vmem:[%s542 + $0x2c] sm:$0xf]
        %v555 = vld [vmem:[%s542 + $0x30] sm:$0xf]
        %v556 = vld [vmem:[%s542 + $0x34] sm:$0xf]
        %v557 = vld [vmem:[%s542 + $0x38] sm:$0xf]
        %v558 = vld [vmem:[%s542 + $0x3c] sm:$0xf]
        %s559 = scalar_lea.vmem %s8, 128
        %v560 = vld [vmem:[%s559] sm:$0xf]
        %v561 = vld [vmem:[%s559 + $0x4] sm:$0xf]
        %v562 = vld [vmem:[%s559 + $0x8] sm:$0xf]
        %v563 = vld [vmem:[%s559 + $0xc] sm:$0xf]
        %v564 = vld [vmem:[%s559 + $0x10] sm:$0xf]
        %v565 = vld [vmem:[%s559 + $0x14] sm:$0xf]
        %v566 = vld [vmem:[%s559 + $0x18] sm:$0xf]
        %v567 = vld [vmem:[%s559 + $0x1c] sm:$0xf]
        %v568 = vld [vmem:[%s559 + $0x20] sm:$0xf]
        %v569 = vld [vmem:[%s559 + $0x24] sm:$0xf]
        %v570 = vld [vmem:[%s559 + $0x28] sm:$0xf]
        %v571 = vld [vmem:[%s559 + $0x2c] sm:$0xf]
        %v572 = vld [vmem:[%s559 + $0x30] sm:$0xf]
        %v573 = vld [vmem:[%s559 + $0x34] sm:$0xf]
        %v574 = vld [vmem:[%s559 + $0x38] sm:$0xf]
        %v575 = vld [vmem:[%s559 + $0x3c] sm:$0xf]
        %v576 = vld [vmem:[%s428] sm:$0xff]
        %v577 = vld [vmem:[%s428 + $0x8] sm:$0xff]
        %v578 = vpack.c.bf16 %v577, %v576
        %v579 = vld [vmem:[#allocation10] sm:$0xf]
        %v580 = vld [vmem:[#allocation10 + $0x4] sm:$0xf]
        %v581 = vld [vmem:[#allocation10 + $0x8] sm:$0xf]
        %v582 = vld [vmem:[#allocation10 + $0xc] sm:$0xf]
        %v583 = vperm.slane %v525, 2
        %v588 = vunpack.c.l.b16 %v579
        %v589 = vunpack.c.l.b16 %v580
        %v590 = vunpack.c.l.b16 %v581
        %v591 = vunpack.c.l.b16 %v582
        %v592 = vpack.c.b16 %v589, %v588
        %v593 = vpack.c.b16 %v591, %v590
        %vm596 = vcmask 261120
        %v598 = vsel %vm596, %v578, 0
        %600 = vmatpush.bf16.msra.mxu0 0
        %601 = vmatpush.bf16.msra.mxu0 0
        %602 = vmatpush.bf16.msra.mxu0 0
        %603 = vmatpush.bf16.msra.mxu0 0
        %604 = vmatpush.bf16.msra.mxu0 0
        %605 = vmatpush.bf16.msra.mxu0 0
        %606 = vmatpush.bf16.msra.mxu0 %v593
        %607 = vmatpush.bf16.msra.mxu0 %v592
        %608 = vmatmul.bf16.gmra.mxu0 %v598
        %v609 = vpop.f32.mrf.mxu0
        %v610 = vadd.f32 %v583, %v609
        %v611 = vpop.f32.mrf.mxu0
        %v612 = vadd.f32 %v583, %v611
        %613 = vdwg.mxu0
        %v614 = vmax.f32 %v610, 0.0
        %v615 = vmax.f32 %v612, 0.0
        %v616 = vpack.c.bf16 %v615, %v614
        %v617 = vperm.slane %v525, 5
        %v634 = vunpack.c.l.b16 %v560
        %v635 = vunpack.c.l.b16 %v561
        %v636 = vunpack.c.l.b16 %v562
        %v637 = vunpack.c.l.b16 %v563
        %v638 = vunpack.c.l.b16 %v564
        %v639 = vunpack.c.l.b16 %v565
        %v640 = vunpack.c.l.b16 %v566
        %v641 = vunpack.c.l.b16 %v567
        %v642 = vunpack.c.l.b16 %v568
        %v643 = vunpack.c.l.b16 %v569
        %v644 = vunpack.c.l.b16 %v570
        %v645 = vunpack.c.l.b16 %v571
        %v646 = vunpack.c.l.b16 %v572
        %v647 = vunpack.c.l.b16 %v573
        %v648 = vunpack.c.l.b16 %v574
        %v649 = vunpack.c.l.b16 %v575
        %v650 = vpack.c.b16 %v635, %v634
        %v651 = vpack.c.b16 %v637, %v636
        %v652 = vpack.c.b16 %v639, %v638
        %v653 = vpack.c.b16 %v641, %v640
        %v654 = vpack.c.b16 %v643, %v642
        %v655 = vpack.c.b16 %v645, %v644
        %v656 = vpack.c.b16 %v647, %v646
        %v657 = vpack.c.b16 %v649, %v648
        %666 = vmatpush.bf16.msra.mxu0 %v657
        %667 = vmatpush.bf16.msra.mxu0 %v656
        %668 = vmatpush.bf16.msra.mxu0 %v655
        %669 = vmatpush.bf16.msra.mxu0 %v654
        %670 = vmatpush.bf16.msra.mxu0 %v653
        %671 = vmatpush.bf16.msra.mxu0 %v652
        %672 = vmatpush.bf16.msra.mxu0 %v651
        %673 = vmatpush.bf16.msra.mxu0 %v650
        %674 = vmatmul.bf16.gmra.mxu0 %v616
        %v675 = vpop.f32.mrf.mxu0
        %v676 = vadd.f32 %v617, %v675
        %v677 = vpop.f32.mrf.mxu0
        %v678 = vadd.f32 %v617, %v677
        %679 = vdwg.mxu0
        %v680 = vld [vmem:[%s438] sm:$0xff]
        %v681 = vpack.c.bf16 %v680, %v680
        %v682 = vld [vmem:[#allocation8] sm:$0xf]
        %v683 = vld [vmem:[#allocation8 + $0x4] sm:$0xf]
        %v684 = vld [vmem:[#allocation8 + $0x8] sm:$0xf]
        %v685 = vld [vmem:[#allocation8 + $0xc] sm:$0xf]
        %v686 = vperm.slane %v525, 1
        %v691 = vunpack.c.l.b16 %v682
        %v692 = vunpack.c.l.b16 %v683
        %v693 = vunpack.c.l.b16 %v684
        %v694 = vunpack.c.l.b16 %v685
        %v695 = vpack.c.b16 %v692, %v691
        %v696 = vpack.c.b16 %v694, %v693
        %v700 = vsel %vm596, %v681, 0
        %702 = vmatpush.bf16.msra.mxu0 0
        %703 = vmatpush.bf16.msra.mxu0 0
        %704 = vmatpush.bf16.msra.mxu0 0
        %705 = vmatpush.bf16.msra.mxu0 0
        %706 = vmatpush.bf16.msra.mxu0 0
        %707 = vmatpush.bf16.msra.mxu0 0
        %708 = vmatpush.bf16.msra.mxu0 %v696
        %709 = vmatpush.bf16.msra.mxu0 %v695
        %710 = vmatmul.bf16.gmra.mxu0 %v700
        %v711 = vpop.f32.mrf.mxu0
        %v712 = vadd.f32 %v686, %v711
        %v713 = vpop.f32.mrf.mxu0
        %714 = vdwg.mxu0
        %v715 = vmax.f32 %v712, 0.0
        %v716 = vpack.c.bf16 %v715, %v715
        %v717 = vperm.slane %v525, 4
        %v734 = vunpack.c.l.b16 %v543
        %v735 = vunpack.c.l.b16 %v544
        %v736 = vunpack.c.l.b16 %v545
        %v737 = vunpack.c.l.b16 %v546
        %v738 = vunpack.c.l.b16 %v547
        %v739 = vunpack.c.l.b16 %v548
        %v740 = vunpack.c.l.b16 %v549
        %v741 = vunpack.c.l.b16 %v550
        %v742 = vunpack.c.l.b16 %v551
        %v743 = vunpack.c.l.b16 %v552
        %v744 = vunpack.c.l.b16 %v553
        %v745 = vunpack.c.l.b16 %v554
        %v746 = vunpack.c.l.b16 %v555
        %v747 = vunpack.c.l.b16 %v556
        %v748 = vunpack.c.l.b16 %v557
        %v749 = vunpack.c.l.b16 %v558
        %v750 = vpack.c.b16 %v735, %v734
        %v751 = vpack.c.b16 %v737, %v736
        %v752 = vpack.c.b16 %v739, %v738
        %v753 = vpack.c.b16 %v741, %v740
        %v754 = vpack.c.b16 %v743, %v742
        %v755 = vpack.c.b16 %v745, %v744
        %v756 = vpack.c.b16 %v747, %v746
        %v757 = vpack.c.b16 %v749, %v748
        %766 = vmatpush.bf16.msra.mxu0 %v757
        %767 = vmatpush.bf16.msra.mxu0 %v756
        %768 = vmatpush.bf16.msra.mxu0 %v755
        %769 = vmatpush.bf16.msra.mxu0 %v754
        %770 = vmatpush.bf16.msra.mxu0 %v753
        %771 = vmatpush.bf16.msra.mxu0 %v752
        %772 = vmatpush.bf16.msra.mxu0 %v751
        %773 = vmatpush.bf16.msra.mxu0 %v750
        %774 = vmatmul.bf16.gmra.mxu0 %v716
        %v775 = vpop.f32.mrf.mxu0
        %v776 = vadd.f32 %v717, %v775
        %v777 = vpop.f32.mrf.mxu0
        %778 = vdwg.mxu0
        %v779 = vlaneseq
        %v780 = vand.u32 %v779, 127
        %v781 = vld [vmem:[%s513] sm:$0xff]
        %v782 = vld [vmem:[%s513 + $0x8] sm:$0xff]
        %v783 = vld [vmem:[%s521] sm:$0xff]
        %v784 = vld [vmem:[%s521 + $0x8] sm:$0xff]
        %v785 = vld [vmem:[%s521 + $0x10] sm:$0xff]
        %v786 = vld [vmem:[%s521 + $0x18] sm:$0xff]
        %v787 = vld [vmem:[%s521 + $0x20] sm:$0xff]
        %v788 = vld [vmem:[%s521 + $0x28] sm:$0xff]
        %v789 = vld [vmem:[%s521 + $0x30] sm:$0xff]
        %v790 = vld [vmem:[%s521 + $0x38] sm:$0xff]
        %v791 = vld [vmem:[%s521 + $0x40] sm:$0xff]
        %v792 = vld [vmem:[%s521 + $0x48] sm:$0xff]
        %793 = vset.pattern.permute.xlu0 0
        %794 = vperm.xlu0 %793, %v783
        %v795 = vpop.permute.xlu0 %794
        %796 = vset.pattern.permute.xlu0 0
        %797 = vperm.xlu0 %796, %v784
        %v798 = vpop.permute.xlu0 %797
        %799 = vset.pattern.permute.xlu0 0
        %800 = vperm.xlu0 %799, %v785
        %v801 = vpop.permute.xlu0 %800
        %802 = vset.pattern.permute.xlu0 0
        %803 = vperm.xlu0 %802, %v786
        %v804 = vpop.permute.xlu0 %803
        %805 = vset.pattern.permute.xlu0 0
        %806 = vperm.xlu0 %805, %v787
        %v807 = vpop.permute.xlu0 %806
        %808 = vset.pattern.permute.xlu0 0
        %809 = vperm.xlu0 %808, %v788
        %v810 = vpop.permute.xlu0 %809
        %811 = vset.pattern.permute.xlu0 0
        %812 = vperm.xlu0 %811, %v789
        %v813 = vpop.permute.xlu0 %812
        %814 = vset.pattern.permute.xlu0 0
        %815 = vperm.xlu0 %814, %v790
        %v816 = vpop.permute.xlu0 %815
        %817 = vset.pattern.permute.xlu0 0
        %818 = vperm.xlu0 %817, %v791
        %v819 = vpop.permute.xlu0 %818
        %820 = vset.pattern.permute.xlu0 0
        %821 = vperm.xlu0 %820, %v792
        %v822 = vpop.permute.xlu0 %821
        %vm823 = vcmp.eq.s32.totalorder %v780, %v795
        %vm824 = vcmp.eq.s32.totalorder %v780, %v798
        %vm825 = vcmp.eq.s32.totalorder %v780, %v801
        %vm826 = vcmp.eq.s32.totalorder %v780, %v804
        %vm827 = vcmp.eq.s32.totalorder %v780, %v807
        %vm828 = vcmp.eq.s32.totalorder %v780, %v810
        %vm829 = vcmp.eq.s32.totalorder %v780, %v813
        %vm830 = vcmp.eq.s32.totalorder %v780, %v816
        %vm831 = vcmp.eq.s32.totalorder %v780, %v819
        %vm832 = vcmp.eq.s32.totalorder %v780, %v822
        %v833 = vsel %vm823, 1, 0
        %v834 = vsel %vm824, 1, 0
        %v835 = vsel %vm825, 1, 0
        %v836 = vsel %vm826, 1, 0
        %v837 = vsel %vm827, 1, 0
        %v838 = vsel %vm828, 1, 0
        %v839 = vsel %vm829, 1, 0
        %v840 = vsel %vm830, 1, 0
        %v841 = vsel %vm831, 1, 0
        %v842 = vsel %vm832, 1, 0
        %v843 = vcvt.s32.f32 %v833
        %v844 = vcvt.s32.f32 %v834
        %v845 = vcvt.s32.f32 %v835
        %v846 = vcvt.s32.f32 %v836
        %v847 = vcvt.s32.f32 %v837
        %v848 = vcvt.s32.f32 %v838
        %v849 = vcvt.s32.f32 %v839
        %v850 = vcvt.s32.f32 %v840
        %v851 = vcvt.s32.f32 %v841
        %v852 = vcvt.s32.f32 %v842
        %vm853 = vcmask 130048
        %v855 = vsel %vm853, %v843, 0
        %v858 = vsel %vm853, %v844, 0
        %v861 = vsel %vm853, %v845, 0
        %v864 = vsel %vm853, %v846, 0
        %v867 = vsel %vm853, %v847, 0
        %v870 = vsel %vm853, %v848, 0
        %v873 = vsel %vm853, %v849, 0
        %v876 = vsel %vm853, %v850, 0
        %v879 = vsel %vm853, %v851, 0
        %v882 = vsel %vm853, %v852, 0
        %884 = vmatpush.msra.mxu0 0.0
        %885 = vmatpush.msra.mxu0 0.0
        %886 = vmatpush.msra.mxu0 0.0
        %887 = vmatpush.msra.mxu0 0.0
        %888 = vmatpush.msra.mxu0 0.0
        %889 = vmatpush.msra.mxu0 0.0
        %890 = vmatpush.msra.mxu0 0.0
        %891 = vmatpush.msra.mxu0 0.0
        %892 = vmatpush.msra.mxu0 0.0
        %893 = vmatpush.msra.mxu0 0.0
        %894 = vmatpush.msra.mxu0 0.0
        %895 = vmatpush.msra.mxu0 0.0
        %896 = vmatpush.msra.mxu0 0.0
        %897 = vmatpush.msra.mxu0 0.0
        %898 = vmatpush.msra.mxu0 %v782
        %899 = vmatpush.msra.mxu0 %v781
        %900 = vmatmul.f32.gmra.mxu0 %v855
        %v901 = vpop.f32.mrf.mxu0
        %v902 = vadd.f32 0.0, %v901
        %903 = vmatmul.f32.gmra.mxu0 %v858
        %v904 = vpop.f32.mrf.mxu0
        %v905 = vadd.f32 0.0, %v904
        %906 = vmatmul.f32.gmra.mxu0 %v861
        %v907 = vpop.f32.mrf.mxu0
        %v908 = vadd.f32 0.0, %v907
        %909 = vmatmul.f32.gmra.mxu0 %v864
        %v910 = vpop.f32.mrf.mxu0
        %v911 = vadd.f32 0.0, %v910
        %912 = vmatmul.f32.gmra.mxu0 %v867
        %v913 = vpop.f32.mrf.mxu0
        %v914 = vadd.f32 0.0, %v913
        %915 = vmatmul.f32.gmra.mxu0 %v870
        %v916 = vpop.f32.mrf.mxu0
        %v917 = vadd.f32 0.0, %v916
        %918 = vmatmul.f32.gmra.mxu0 %v873
        %v919 = vpop.f32.mrf.mxu0
        %v920 = vadd.f32 0.0, %v919
        %921 = vmatmul.f32.gmra.mxu0 %v876
        %v922 = vpop.f32.mrf.mxu0
        %v923 = vadd.f32 0.0, %v922
        %924 = vmatmul.f32.gmra.mxu0 %v879
        %v925 = vpop.f32.mrf.mxu0
        %v926 = vadd.f32 0.0, %v925
        %927 = vmatmul.f32.gmra.mxu0 %v882
        %v928 = vpop.f32.mrf.mxu0
        %v929 = vadd.f32 0.0, %v928
        %930 = vdwg.mxu0
        %v931 = vsub.f32 %v902, %v781
        %v932 = vsub.f32 %v905, %v782
        %v933 = vsub.f32 %v908, %v781
        %v934 = vsub.f32 %v911, %v782
        %v935 = vsub.f32 %v914, %v781
        %v936 = vsub.f32 %v917, %v782
        %v937 = vsub.f32 %v920, %v781
        %v938 = vsub.f32 %v923, %v782
        %v939 = vsub.f32 %v926, %v781
        %v940 = vsub.f32 %v929, %v782
        %v941 = vmul.f32 %v931, %v931
        %v942 = vmul.f32 %v932, %v932
        %v943 = vmul.f32 %v933, %v933
        %v944 = vmul.f32 %v934, %v934
        %v945 = vmul.f32 %v935, %v935
        %v946 = vmul.f32 %v936, %v936
        %v947 = vmul.f32 %v937, %v937
        %v948 = vmul.f32 %v938, %v938
        %v949 = vmul.f32 %v939, %v939
        %v950 = vmul.f32 %v940, %v940
        %vm951 = vcmask 23552
        %v952 = vsel %vm951, %v941, 0.0
        %953 = vadd.xlane.f32.xlu0 %v952
        %v954 = vpop.xlane.xlu0 %953
        %v955 = vsel %vm951, %v942, 0.0
        %956 = vadd.xlane.f32.xlu0 %v955
        %v957 = vpop.xlane.xlu0 %956
        %v958 = vsel %vm951, %v943, 0.0
        %959 = vadd.xlane.f32.xlu0 %v958
        %v960 = vpop.xlane.xlu0 %959
        %v961 = vsel %vm951, %v944, 0.0
        %962 = vadd.xlane.f32.xlu0 %v961
        %v963 = vpop.xlane.xlu0 %962
        %v964 = vsel %vm951, %v945, 0.0
        %965 = vadd.xlane.f32.xlu0 %v964
        %v966 = vpop.xlane.xlu0 %965
        %v967 = vsel %vm951, %v946, 0.0
        %968 = vadd.xlane.f32.xlu0 %v967
        %v969 = vpop.xlane.xlu0 %968
        %v970 = vsel %vm951, %v947, 0.0
        %971 = vadd.xlane.f32.xlu0 %v970
        %v972 = vpop.xlane.xlu0 %971
        %v973 = vsel %vm951, %v948, 0.0
        %974 = vadd.xlane.f32.xlu0 %v973
        %v975 = vpop.xlane.xlu0 %974
        %v976 = vsel %vm951, %v949, 0.0
        %977 = vadd.xlane.f32.xlu0 %v976
        %v978 = vpop.xlane.xlu0 %977
        %v979 = vsel %vm951, %v950, 0.0
        %980 = vadd.xlane.f32.xlu0 %v979
        %v981 = vpop.xlane.xlu0 %980
        %v982 = vrsqrt.pop %v954
        %v983 = vmul.f32 %v982, %v954
        %v984 = vmul.f32 %v983, %v982
        %v985 = vmul.f32 0.5, %v984
        %v986 = vsub.f32 1.5, %v985
        %v987 = vmul.f32 %v982, %v986
        %v988 = vmul.f32 %v954, %v987
        %vm989 = vcmp.eq.f32.partialorder %v954, inf
        %v990 = vsel %vm989, %v954, %v988
        %vm991 = vcmp.eq.f32.partialorder %v954, 0.0
        %v992 = vand.u32 %v954, 2147483648
        %v993 = vsel %vm991, %v992, %v990
        %v994 = vrsqrt.pop %v957
        %v995 = vmul.f32 %v994, %v957
        %v996 = vmul.f32 %v995, %v994
        %v997 = vmul.f32 0.5, %v996
        %v998 = vsub.f32 1.5, %v997
        %v999 = vmul.f32 %v994, %v998
        %v1000 = vmul.f32 %v957, %v999
        %vm1001 = vcmp.eq.f32.partialorder %v957, inf
        %v1002 = vsel %vm1001, %v957, %v1000
        %vm1003 = vcmp.eq.f32.partialorder %v957, 0.0
        %v1004 = vand.u32 %v957, 2147483648
        %v1005 = vsel %vm1003, %v1004, %v1002
        %v1006 = vrsqrt.pop %v960
        %v1007 = vmul.f32 %v1006, %v960
        %v1008 = vmul.f32 %v1007, %v1006
        %v1009 = vmul.f32 0.5, %v1008
        %v1010 = vsub.f32 1.5, %v1009
        %v1011 = vmul.f32 %v1006, %v1010
        %v1012 = vmul.f32 %v960, %v1011
        %vm1013 = vcmp.eq.f32.partialorder %v960, inf
        %v1014 = vsel %vm1013, %v960, %v1012
        %vm1015 = vcmp.eq.f32.partialorder %v960, 0.0
        %v1016 = vand.u32 %v960, 2147483648
        %v1017 = vsel %vm1015, %v1016, %v1014
        %v1018 = vrsqrt.pop %v963
        %v1019 = vmul.f32 %v1018, %v963
        %v1020 = vmul.f32 %v1019, %v1018
        %v1021 = vmul.f32 0.5, %v1020
        %v1022 = vsub.f32 1.5, %v1021
        %v1023 = vmul.f32 %v1018, %v1022
        %v1024 = vmul.f32 %v963, %v1023
        %vm1025 = vcmp.eq.f32.partialorder %v963, inf
        %v1026 = vsel %vm1025, %v963, %v1024
        %vm1027 = vcmp.eq.f32.partialorder %v963, 0.0
        %v1028 = vand.u32 %v963, 2147483648
        %v1029 = vsel %vm1027, %v1028, %v1026
        %v1030 = vrsqrt.pop %v966
        %v1031 = vmul.f32 %v1030, %v966
        %v1032 = vmul.f32 %v1031, %v1030
        %v1033 = vmul.f32 0.5, %v1032
        %v1034 = vsub.f32 1.5, %v1033
        %v1035 = vmul.f32 %v1030, %v1034
        %v1036 = vmul.f32 %v966, %v1035
        %vm1037 = vcmp.eq.f32.partialorder %v966, inf
        %v1038 = vsel %vm1037, %v966, %v1036
        %vm1039 = vcmp.eq.f32.partialorder %v966, 0.0
        %v1040 = vand.u32 %v966, 2147483648
        %v1041 = vsel %vm1039, %v1040, %v1038
        %v1042 = vrsqrt.pop %v969
        %v1043 = vmul.f32 %v1042, %v969
        %v1044 = vmul.f32 %v1043, %v1042
        %v1045 = vmul.f32 0.5, %v1044
        %v1046 = vsub.f32 1.5, %v1045
        %v1047 = vmul.f32 %v1042, %v1046
        %v1048 = vmul.f32 %v969, %v1047
        %vm1049 = vcmp.eq.f32.partialorder %v969, inf
        %v1050 = vsel %vm1049, %v969, %v1048
        %vm1051 = vcmp.eq.f32.partialorder %v969, 0.0
        %v1052 = vand.u32 %v969, 2147483648
        %v1053 = vsel %vm1051, %v1052, %v1050
        %v1054 = vrsqrt.pop %v972
        %v1055 = vmul.f32 %v1054, %v972
        %v1056 = vmul.f32 %v1055, %v1054
        %v1057 = vmul.f32 0.5, %v1056
        %v1058 = vsub.f32 1.5, %v1057
        %v1059 = vmul.f32 %v1054, %v1058
        %v1060 = vmul.f32 %v972, %v1059
        %vm1061 = vcmp.eq.f32.partialorder %v972, inf
        %v1062 = vsel %vm1061, %v972, %v1060
        %vm1063 = vcmp.eq.f32.partialorder %v972, 0.0
        %v1064 = vand.u32 %v972, 2147483648
        %v1065 = vsel %vm1063, %v1064, %v1062
        %v1066 = vrsqrt.pop %v975
        %v1067 = vmul.f32 %v1066, %v975
        %v1068 = vmul.f32 %v1067, %v1066
        %v1069 = vmul.f32 0.5, %v1068
        %v1070 = vsub.f32 1.5, %v1069
        %v1071 = vmul.f32 %v1066, %v1070
        %v1072 = vmul.f32 %v975, %v1071
        %vm1073 = vcmp.eq.f32.partialorder %v975, inf
        %v1074 = vsel %vm1073, %v975, %v1072
        %vm1075 = vcmp.eq.f32.partialorder %v975, 0.0
        %v1076 = vand.u32 %v975, 2147483648
        %v1077 = vsel %vm1075, %v1076, %v1074
        %v1078 = vrsqrt.pop %v978
        %v1079 = vmul.f32 %v1078, %v978
        %v1080 = vmul.f32 %v1079, %v1078
        %v1081 = vmul.f32 0.5, %v1080
        %v1082 = vsub.f32 1.5, %v1081
        %v1083 = vmul.f32 %v1078, %v1082
        %v1084 = vmul.f32 %v978, %v1083
        %vm1085 = vcmp.eq.f32.partialorder %v978, inf
        %v1086 = vsel %vm1085, %v978, %v1084
        %vm1087 = vcmp.eq.f32.partialorder %v978, 0.0
        %v1088 = vand.u32 %v978, 2147483648
        %v1089 = vsel %vm1087, %v1088, %v1086
        %v1090 = vrsqrt.pop %v981
        %v1091 = vmul.f32 %v1090, %v981
        %v1092 = vmul.f32 %v1091, %v1090
        %v1093 = vmul.f32 0.5, %v1092
        %v1094 = vsub.f32 1.5, %v1093
        %v1095 = vmul.f32 %v1090, %v1094
        %v1096 = vmul.f32 %v981, %v1095
        %vm1097 = vcmp.eq.f32.partialorder %v981, inf
        %v1098 = vsel %vm1097, %v981, %v1096
        %vm1099 = vcmp.eq.f32.partialorder %v981, 0.0
        %v1100 = vand.u32 %v981, 2147483648
        %v1101 = vsel %vm1099, %v1100, %v1098
        %v1103 = vrot.slane %v523, 3
        %v1105 = vsel %vm951, %v781, 0
        %v1108 = vsel %vm951, %v782, 0
        %vm1110 = vcmask 1042432
        %v1111 = vsel %vm1110, %v1103, 0
        %1113 = vmatpush.msra.mxu0 0.0
        %1114 = vmatpush.msra.mxu0 0.0
        %1115 = vmatpush.msra.mxu0 0.0
        %1116 = vmatpush.msra.mxu0 0.0
        %1117 = vmatpush.msra.mxu0 0.0
        %1118 = vmatpush.msra.mxu0 0.0
        %1119 = vmatpush.msra.mxu0 0.0
        %1120 = vmatpush.msra.mxu0 0.0
        %1121 = vmatpush.msra.mxu0 0.0
        %1122 = vmatpush.msra.mxu0 0.0
        %1123 = vmatpush.msra.mxu0 0.0
        %1124 = vmatpush.msra.mxu0 0.0
        %1125 = vmatpush.msra.mxu0 0.0
        %1126 = vmatpush.msra.mxu0 0.0
        %1127 = vmatpush.msra.mxu0 0.0
        %1128 = vmatpush.msra.mxu0 %v1111
        %1129 = vmatmul.f32.gmra.mxu0 %v1105
        %v1130 = vpop.f32.mrf.mxu0
        %v1131 = vadd.f32 0.0, %v1130
        %1132 = vmatmul.f32.gmra.mxu0 %v1108
        %v1133 = vpop.f32.mrf.mxu0
        %v1134 = vadd.f32 0.0, %v1133
        %1135 = vmatmul.f32.gmra.mxu0 %v1105
        %v1136 = vpop.f32.mrf.mxu0
        %v1137 = vadd.f32 0.0, %v1136
        %1138 = vmatmul.f32.gmra.mxu0 %v1108
        %v1139 = vpop.f32.mrf.mxu0
        %v1140 = vadd.f32 0.0, %v1139
        %1141 = vmatmul.f32.gmra.mxu0 %v1105
        %v1142 = vpop.f32.mrf.mxu0
        %v1143 = vadd.f32 0.0, %v1142
        %1144 = vmatmul.f32.gmra.mxu0 %v1108
        %v1145 = vpop.f32.mrf.mxu0
        %v1146 = vadd.f32 0.0, %v1145
        %1147 = vmatmul.f32.gmra.mxu0 %v1105
        %v1148 = vpop.f32.mrf.mxu0
        %v1149 = vadd.f32 0.0, %v1148
        %1150 = vmatmul.f32.gmra.mxu0 %v1108
        %v1151 = vpop.f32.mrf.mxu0
        %v1152 = vadd.f32 0.0, %v1151
        %1153 = vmatmul.f32.gmra.mxu0 %v1105
        %v1154 = vpop.f32.mrf.mxu0
        %v1155 = vadd.f32 0.0, %v1154
        %1156 = vmatmul.f32.gmra.mxu0 %v1108
        %v1157 = vpop.f32.mrf.mxu0
        %v1158 = vadd.f32 0.0, %v1157
        %1159 = vdwg.mxu0
        %v1161 = vsel %vm951, %v902, 0
        %v1164 = vsel %vm951, %v905, 0
        %v1167 = vsel %vm951, %v908, 0
        %v1170 = vsel %vm951, %v911, 0
        %v1173 = vsel %vm951, %v914, 0
        %v1176 = vsel %vm951, %v917, 0
        %v1179 = vsel %vm951, %v920, 0
        %v1182 = vsel %vm951, %v923, 0
        %v1185 = vsel %vm951, %v926, 0
        %v1188 = vsel %vm951, %v929, 0
        %v1190 = vsel %vm1110, %v523, 0
        %1192 = vmatpush.msra.mxu0 0.0
        %1193 = vmatpush.msra.mxu0 0.0
        %1194 = vmatpush.msra.mxu0 0.0
        %1195 = vmatpush.msra.mxu0 0.0
        %1196 = vmatpush.msra.mxu0 0.0
        %1197 = vmatpush.msra.mxu0 0.0
        %1198 = vmatpush.msra.mxu0 0.0
        %1199 = vmatpush.msra.mxu0 0.0
        %1200 = vmatpush.msra.mxu0 0.0
        %1201 = vmatpush.msra.mxu0 0.0
        %1202 = vmatpush.msra.mxu0 0.0
        %1203 = vmatpush.msra.mxu0 0.0
        %1204 = vmatpush.msra.mxu0 0.0
        %1205 = vmatpush.msra.mxu0 0.0
        %1206 = vmatpush.msra.mxu0 0.0
        %1207 = vmatpush.msra.mxu0 %v1190
        %1208 = vmatmul.f32.gmra.mxu0 %v1161
        %v1209 = vpop.f32.mrf.mxu0
        %v1210 = vadd.f32 %v1131, %v1209
        %1211 = vmatmul.f32.gmra.mxu0 %v1164
        %v1212 = vpop.f32.mrf.mxu0
        %v1213 = vadd.f32 %v1134, %v1212
        %1214 = vmatmul.f32.gmra.mxu0 %v1167
        %v1215 = vpop.f32.mrf.mxu0
        %v1216 = vadd.f32 %v1137, %v1215
        %1217 = vmatmul.f32.gmra.mxu0 %v1170
        %v1218 = vpop.f32.mrf.mxu0
        %v1219 = vadd.f32 %v1140, %v1218
        %1220 = vmatmul.f32.gmra.mxu0 %v1173
        %v1221 = vpop.f32.mrf.mxu0
        %v1222 = vadd.f32 %v1143, %v1221
        %1223 = vmatmul.f32.gmra.mxu0 %v1176
        %v1224 = vpop.f32.mrf.mxu0
        %v1225 = vadd.f32 %v1146, %v1224
        %1226 = vmatmul.f32.gmra.mxu0 %v1179
        %v1227 = vpop.f32.mrf.mxu0
        %v1228 = vadd.f32 %v1149, %v1227
        %1229 = vmatmul.f32.gmra.mxu0 %v1182
        %v1230 = vpop.f32.mrf.mxu0
        %v1231 = vadd.f32 %v1152, %v1230
        %1232 = vmatmul.f32.gmra.mxu0 %v1185
        %v1233 = vpop.f32.mrf.mxu0
        %v1234 = vadd.f32 %v1155, %v1233
        %1235 = vmatmul.f32.gmra.mxu0 %v1188
        %v1236 = vpop.f32.mrf.mxu0
        %v1237 = vadd.f32 %v1158, %v1236
        %1238 = vdwg.mxu0
        %vm1240 = vcmask 1041408
        %v1241 = vrot.slane %v523, 6
        %v1242 = vrot.slane %v524, 6
        %v1243 = vsel %vm1240, %v1241, %v1242
        %v1245 = vsel %vm951, %v931, 0
        %v1248 = vsel %vm951, %v932, 0
        %v1251 = vsel %vm951, %v933, 0
        %v1254 = vsel %vm951, %v934, 0
        %v1257 = vsel %vm951, %v935, 0
        %v1260 = vsel %vm951, %v936, 0
        %v1263 = vsel %vm951, %v937, 0
        %v1266 = vsel %vm951, %v938, 0
        %v1269 = vsel %vm951, %v939, 0
        %v1272 = vsel %vm951, %v940, 0
        %v1274 = vsel %vm1110, %v1243, 0
        %1276 = vmatpush.msra.mxu0 0.0
        %1277 = vmatpush.msra.mxu0 0.0
        %1278 = vmatpush.msra.mxu0 0.0
        %1279 = vmatpush.msra.mxu0 0.0
        %1280 = vmatpush.msra.mxu0 0.0
        %1281 = vmatpush.msra.mxu0 0.0
        %1282 = vmatpush.msra.mxu0 0.0
        %1283 = vmatpush.msra.mxu0 0.0
        %1284 = vmatpush.msra.mxu0 0.0
        %1285 = vmatpush.msra.mxu0 0.0
        %1286 = vmatpush.msra.mxu0 0.0
        %1287 = vmatpush.msra.mxu0 0.0
        %1288 = vmatpush.msra.mxu0 0.0
        %1289 = vmatpush.msra.mxu0 0.0
        %1290 = vmatpush.msra.mxu0 0.0
        %1291 = vmatpush.msra.mxu0 %v1274
        %1292 = vmatmul.f32.gmra.mxu0 %v1245
        %v1293 = vpop.f32.mrf.mxu0
        %v1294 = vadd.f32 0.0, %v1293
        %1295 = vmatmul.f32.gmra.mxu0 %v1248
        %v1296 = vpop.f32.mrf.mxu0
        %v1297 = vadd.f32 0.0, %v1296
        %1298 = vmatmul.f32.gmra.mxu0 %v1251
        %v1299 = vpop.f32.mrf.mxu0
        %v1300 = vadd.f32 0.0, %v1299
        %1301 = vmatmul.f32.gmra.mxu0 %v1254
        %v1302 = vpop.f32.mrf.mxu0
        %v1303 = vadd.f32 0.0, %v1302
        %1304 = vmatmul.f32.gmra.mxu0 %v1257
        %v1305 = vpop.f32.mrf.mxu0
        %v1306 = vadd.f32 0.0, %v1305
        %1307 = vmatmul.f32.gmra.mxu0 %v1260
        %v1308 = vpop.f32.mrf.mxu0
        %v1309 = vadd.f32 0.0, %v1308
        %1310 = vmatmul.f32.gmra.mxu0 %v1263
        %v1311 = vpop.f32.mrf.mxu0
        %v1312 = vadd.f32 0.0, %v1311
        %1313 = vmatmul.f32.gmra.mxu0 %v1266
        %v1314 = vpop.f32.mrf.mxu0
        %v1315 = vadd.f32 0.0, %v1314
        %1316 = vmatmul.f32.gmra.mxu0 %v1269
        %v1317 = vpop.f32.mrf.mxu0
        %v1318 = vadd.f32 0.0, %v1317
        %1319 = vmatmul.f32.gmra.mxu0 %v1272
        %v1320 = vpop.f32.mrf.mxu0
        %v1321 = vadd.f32 0.0, %v1320
        %1322 = vdwg.mxu0
        %v1323 = vadd.f32 %v1210, %v1294
        %v1324 = vadd.f32 %v1213, %v1297
        %v1325 = vadd.f32 %v1216, %v1300
        %v1326 = vadd.f32 %v1219, %v1303
        %v1327 = vadd.f32 %v1222, %v1306
        %v1328 = vadd.f32 %v1225, %v1309
        %v1329 = vadd.f32 %v1228, %v1312
        %v1330 = vadd.f32 %v1231, %v1315
        %v1331 = vadd.f32 %v1234, %v1318
        %v1332 = vadd.f32 %v1237, %v1321
        %v1333 = vperm.slane %v524, 1
        %v1334 = vmul.f32 %v993, %v1333
        %v1335 = vmul.f32 %v1005, %v1333
        %v1336 = vmul.f32 %v1017, %v1333
        %v1337 = vmul.f32 %v1029, %v1333
        %v1338 = vmul.f32 %v1041, %v1333
        %v1339 = vmul.f32 %v1053, %v1333
        %v1340 = vmul.f32 %v1065, %v1333
        %v1341 = vmul.f32 %v1077, %v1333
        %v1342 = vmul.f32 %v1089, %v1333
        %v1343 = vmul.f32 %v1101, %v1333
        %v1344 = vadd.f32 %v1323, %v1334
        %v1345 = vadd.f32 %v1324, %v1335
        %v1346 = vadd.f32 %v1325, %v1336
        %v1347 = vadd.f32 %v1326, %v1337
        %v1348 = vadd.f32 %v1327, %v1338
        %v1349 = vadd.f32 %v1328, %v1339
        %v1350 = vadd.f32 %v1329, %v1340
        %v1351 = vadd.f32 %v1330, %v1341
        %v1352 = vadd.f32 %v1331, %v1342
        %v1353 = vadd.f32 %v1332, %v1343
        %v1354 = vperm.slane %v525, 0
        %v1355 = vadd.f32 %v1344, %v1354
        %v1356 = vadd.f32 %v1345, %v1354
        %v1357 = vadd.f32 %v1346, %v1354
        %v1358 = vadd.f32 %v1347, %v1354
        %v1359 = vadd.f32 %v1348, %v1354
        %v1360 = vadd.f32 %v1349, %v1354
        %v1361 = vadd.f32 %v1350, %v1354
        %v1362 = vadd.f32 %v1351, %v1354
        %v1363 = vadd.f32 %v1352, %v1354
        %v1364 = vadd.f32 %v1353, %v1354
        %v1365 = vmax.f32 %v1355, 0.0
        %v1366 = vmax.f32 %v1356, 0.0
        %v1367 = vmax.f32 %v1357, 0.0
        %v1368 = vmax.f32 %v1358, 0.0
        %v1369 = vmax.f32 %v1359, 0.0
        %v1370 = vmax.f32 %v1360, 0.0
        %v1371 = vmax.f32 %v1361, 0.0
        %v1372 = vmax.f32 %v1362, 0.0
        %v1373 = vmax.f32 %v1363, 0.0
        %v1374 = vmax.f32 %v1364, 0.0
        %v1375 = vpack.c.bf16 %v1366, %v1365
        %v1376 = vpack.c.bf16 %v1368, %v1367
        %v1377 = vpack.c.bf16 %v1370, %v1369
        %v1378 = vpack.c.bf16 %v1372, %v1371
        %v1379 = vpack.c.bf16 %v1374, %v1373
        %v1380 = vperm.slane %v525, 3
        %v1397 = vunpack.c.l.b16 %v526
        %v1398 = vunpack.c.l.b16 %v527
        %v1399 = vunpack.c.l.b16 %v528
        %v1400 = vunpack.c.l.b16 %v529
        %v1401 = vunpack.c.l.b16 %v530
        %v1402 = vunpack.c.l.b16 %v531
        %v1403 = vunpack.c.l.b16 %v532
        %v1404 = vunpack.c.l.b16 %v533
        %v1405 = vunpack.c.l.b16 %v534
        %v1406 = vunpack.c.l.b16 %v535
        %v1407 = vunpack.c.l.b16 %v536
        %v1408 = vunpack.c.l.b16 %v537
        %v1409 = vunpack.c.l.b16 %v538
        %v1410 = vunpack.c.l.b16 %v539
        %v1411 = vunpack.c.l.b16 %v540
        %v1412 = vunpack.c.l.b16 %v541
        %v1413 = vpack.c.b16 %v1398, %v1397
        %v1414 = vpack.c.b16 %v1400, %v1399
        %v1415 = vpack.c.b16 %v1402, %v1401
        %v1416 = vpack.c.b16 %v1404, %v1403
        %v1417 = vpack.c.b16 %v1406, %v1405
        %v1418 = vpack.c.b16 %v1408, %v1407
        %v1419 = vpack.c.b16 %v1410, %v1409
        %v1420 = vpack.c.b16 %v1412, %v1411
        %1429 = vmatpush.bf16.msra.mxu0 %v1420
        %1430 = vmatpush.bf16.msra.mxu0 %v1419
        %1431 = vmatpush.bf16.msra.mxu0 %v1418
        %1432 = vmatpush.bf16.msra.mxu0 %v1417
        %1433 = vmatpush.bf16.msra.mxu0 %v1416
        %1434 = vmatpush.bf16.msra.mxu0 %v1415
        %1435 = vmatpush.bf16.msra.mxu0 %v1414
        %1436 = vmatpush.bf16.msra.mxu0 %v1413
        %1437 = vmatmul.bf16.gmra.mxu0 %v1375
        %v1438 = vpop.f32.mrf.mxu0
        %v1439 = vadd.f32 %v1380, %v1438
        %v1440 = vpop.f32.mrf.mxu0
        %v1441 = vadd.f32 %v1380, %v1440
        %1442 = vmatmul.bf16.gmra.mxu0 %v1376
        %v1443 = vpop.f32.mrf.mxu0
        %v1444 = vadd.f32 %v1380, %v1443
        %v1445 = vpop.f32.mrf.mxu0
        %v1446 = vadd.f32 %v1380, %v1445
        %1447 = vmatmul.bf16.gmra.mxu0 %v1377
        %v1448 = vpop.f32.mrf.mxu0
        %v1449 = vadd.f32 %v1380, %v1448
        %v1450 = vpop.f32.mrf.mxu0
        %v1451 = vadd.f32 %v1380, %v1450
        %1452 = vmatmul.bf16.gmra.mxu0 %v1378
        %v1453 = vpop.f32.mrf.mxu0
        %v1454 = vadd.f32 %v1380, %v1453
        %v1455 = vpop.f32.mrf.mxu0
        %v1456 = vadd.f32 %v1380, %v1455
        %1457 = vmatmul.bf16.gmra.mxu0 %v1379
        %v1458 = vpop.f32.mrf.mxu0
        %v1459 = vadd.f32 %v1380, %v1458
        %v1460 = vpop.f32.mrf.mxu0
        %v1461 = vadd.f32 %v1380, %v1460
        %1462 = vdwg.mxu0
        %1463 = vmatpush.xpose.msra.mxu0 0.0
        %1464 = vmatpush.xpose.msra.mxu0 0.0
        %1465 = vmatpush.xpose.msra.mxu0 0.0
        %1466 = vmatpush.xpose.msra.mxu0 0.0
        %1467 = vmatpush.xpose.msra.mxu0 0.0
        %1468 = vmatpush.xpose.msra.mxu0 0.0
        %1469 = vmatpush.xpose.msra.mxu0 0.0
        %1470 = vmatpush.xpose.msra.mxu0 0.0
        %1471 = vmatpush.xpose.msra.mxu0 0.0
        %1472 = vmatpush.xpose.msra.mxu0 0.0
        %1473 = vmatpush.xpose.msra.mxu0 0.0
        %1474 = vmatpush.xpose.msra.mxu0 0.0
        %1475 = vmatpush.xpose.msra.mxu0 0.0
        %1476 = vmatpush.xpose.msra.mxu0 0.0
        %1477 = vmatpush.xpose.msra.mxu0 0.0
        %1478 = vmatpush.xpose.msra.mxu0 %v776
        %1479 = vmatmul.f32.gmra.mxu0 %v676
        %v1480 = vpop.f32.mrf.mxu0
        %v1481 = vadd.f32 0.0, %v1480
        %1482 = vmatmul.f32.gmra.mxu0 %v678
        %v1483 = vpop.f32.mrf.mxu0
        %v1484 = vadd.f32 0.0, %v1483
        %1485 = vdwg.mxu0
        %vm1486 = vcmask 64512
        %v1487 = vsel %vm1486, %v1481, -inf
        %1488 = vmax.xlane.f32.xlu0 %v1487
        %v1489 = vpop.xlane.xlu0 %1488
        %v1490 = vsel %vm1486, %v1484, -inf
        %1491 = vmax.xlane.f32.xlu0 %v1490
        %v1492 = vpop.xlane.xlu0 %1491
        %v1493 = vsub.f32 %v1481, %v1489
        %v1494 = vsub.f32 %v1484, %v1492
        %v1495 = vmul.f32 %v1493, 1.442695
        %v1496 = vpow.pop %v1495
        %v1497 = vmul.f32 %v1494, 1.442695
        %v1498 = vpow.pop %v1497
        %v1499 = vsel %vm1486, %v1496, 0.0
        %1500 = vadd.xlane.f32.xlu0 %v1499
        %v1501 = vpop.xlane.xlu0 %1500
        %v1502 = vsel %vm1486, %v1498, 0.0
        %1503 = vadd.xlane.f32.xlu0 %v1502
        %v1504 = vpop.xlane.xlu0 %1503
        %v1505 = vrcp.pop %v1501
        %v1506 = vrcp.pop %v1504
        %v1507 = vmul.f32 %v1496, %v1505
        %v1508 = vmul.f32 %v1498, %v1506
        %v1509 = vld [vmem:[%s516] sm:$0x1]
        %v1511 = vperm.slane %v1509, 0
        %v1513 = vmul.f32 %v1507, %v1511
        %v1514 = vmul.f32 %v1508, %v1511
        %v1515 = vsel %vm1486, %v1513, 0.0
        %1516 = vadd.xlane.f32.xlu0 %v1515
        %v1517 = vpop.xlane.xlu0 %1516
        %v1518 = vsel %vm1486, %v1514, 0.0
        %1519 = vadd.xlane.f32.xlu0 %v1518
        %v1520 = vpop.xlane.xlu0 %1519
        %v1521 = vadd.f32 %v1517, 1e-07
        %v1522 = vadd.f32 %v1520, 1e-07
        %v1523 = vrcp.pop %v1521
        %v1524 = vrcp.pop %v1522
        %v1525 = vmul.f32 %v1513, %v1523
        %v1526 = vmul.f32 %v1514, %v1524
        %v1528 = vsel %vm1486, %v1525, 0
        %v1531 = vsel %vm1486, %v1526, 0
        %1533 = vmatpush.msra.mxu0 0.0
        %1534 = vmatpush.msra.mxu0 0.0
        %1535 = vmatpush.msra.mxu0 0.0
        %1536 = vmatpush.msra.mxu0 0.0
        %1537 = vmatpush.msra.mxu0 0.0
        %1538 = vmatpush.msra.mxu0 0.0
        %1539 = vmatpush.msra.mxu0 0.0
        %1540 = vmatpush.msra.mxu0 0.0
        %1541 = vmatpush.msra.mxu0 0.0
        %1542 = vmatpush.msra.mxu0 0.0
        %1543 = vmatpush.msra.mxu0 0.0
        %1544 = vmatpush.msra.mxu0 0.0
        %1545 = vmatpush.msra.mxu0 0.0
        %1546 = vmatpush.msra.mxu0 0.0
        %1547 = vmatpush.msra.mxu0 0.0
        %1548 = vmatpush.msra.mxu0 %v776
        %1549 = vmatmul.f32.gmra.mxu0 %v1528
        %v1550 = vpop.f32.mrf.mxu0
        %v1551 = vadd.f32 0.0, %v1550
        %1552 = vmatmul.f32.gmra.mxu0 %v1531
        %v1553 = vpop.f32.mrf.mxu0
        %v1554 = vadd.f32 0.0, %v1553
        %1555 = vdwg.mxu0
        %v1556 = vmul.f32 %v676, %v1551
        %v1557 = vmul.f32 %v678, %v1554
        %1558 = vmatpush.msra.mxu0 0.0
        %1559 = vmatpush.msra.mxu0 0.0
        %1560 = vmatpush.msra.mxu0 0.0
        %1561 = vmatpush.msra.mxu0 0.0
        %1562 = vmatpush.msra.mxu0 0.0
        %1563 = vmatpush.msra.mxu0 0.0
        %1564 = vmatpush.msra.mxu0 0.0
        %1565 = vmatpush.msra.mxu0 0.0
        %1566 = vmatpush.msra.mxu0 0.0
        %1567 = vmatpush.msra.mxu0 0.0
        %1568 = vmatpush.msra.mxu0 0.0
        %1569 = vmatpush.msra.mxu0 0.0
        %1570 = vmatpush.msra.mxu0 0.0
        %1571 = vmatpush.msra.mxu0 0.0
        %1572 = vmatpush.msra.mxu0 %v1557
        %1573 = vmatpush.msra.mxu0 %v1556
        %1574 = vmatmul.f32.gmra.mxu0 %v855
        %v1575 = vpop.f32.mrf.mxu0
        %v1576 = vadd.f32 0.0, %v1575
        %1577 = vmatmul.f32.gmra.mxu0 %v858
        %v1578 = vpop.f32.mrf.mxu0
        %v1579 = vadd.f32 0.0, %v1578
        %1580 = vmatmul.f32.gmra.mxu0 %v861
        %v1581 = vpop.f32.mrf.mxu0
        %v1582 = vadd.f32 0.0, %v1581
        %1583 = vmatmul.f32.gmra.mxu0 %v864
        %v1584 = vpop.f32.mrf.mxu0
        %v1585 = vadd.f32 0.0, %v1584
        %1586 = vmatmul.f32.gmra.mxu0 %v867
        %v1587 = vpop.f32.mrf.mxu0
        %v1588 = vadd.f32 0.0, %v1587
        %1589 = vmatmul.f32.gmra.mxu0 %v870
        %v1590 = vpop.f32.mrf.mxu0
        %v1591 = vadd.f32 0.0, %v1590
        %1592 = vmatmul.f32.gmra.mxu0 %v873
        %v1593 = vpop.f32.mrf.mxu0
        %v1594 = vadd.f32 0.0, %v1593
        %1595 = vmatmul.f32.gmra.mxu0 %v876
        %v1596 = vpop.f32.mrf.mxu0
        %v1597 = vadd.f32 0.0, %v1596
        %1598 = vmatmul.f32.gmra.mxu0 %v879
        %v1599 = vpop.f32.mrf.mxu0
        %v1600 = vadd.f32 0.0, %v1599
        %1601 = vmatmul.f32.gmra.mxu0 %v882
        %v1602 = vpop.f32.mrf.mxu0
        %v1603 = vadd.f32 0.0, %v1602
        %1604 = vdwg.mxu0
        %v1605 = vmul.f32 %v1576, %v1439
        %v1606 = vmul.f32 %v1579, %v1441
        %v1607 = vmul.f32 %v1582, %v1444
        %v1608 = vmul.f32 %v1585, %v1446
        %v1609 = vmul.f32 %v1588, %v1449
        %v1610 = vmul.f32 %v1591, %v1451
        %v1611 = vmul.f32 %v1594, %v1454
        %v1612 = vmul.f32 %v1597, %v1456
        %v1613 = vmul.f32 %v1600, %v1459
        %v1614 = vmul.f32 %v1603, %v1461
        %v1615 = vadd.f32 %v1605, %v1607
        %v1616 = vadd.f32 %v1615, %v1609
        %v1617 = vadd.f32 %v1616, %v1611
        %v1618 = vadd.f32 %v1617, %v1613
        %v1619 = vadd.f32 %v1606, %v1608
        %v1620 = vadd.f32 %v1619, %v1610
        %v1621 = vadd.f32 %v1620, %v1612
        %v1622 = vadd.f32 %v1621, %v1614
        %v1623 = vadd.f32 %v1618, %v676
        %v1624 = vadd.f32 %v1622, %v678
        %1625 = vst [vmem:[%s508] sm:$0xff] %v1623
        %1626 = vst [vmem:[%s508 + $0x8] sm:$0xff] %v1624
        %s1627 = sand.u32 %s274, 1
        %s1628 = scalar_lea.sflag [#allocation4], %s1627
        %s1629 = sand.u32 %s274, 1
        %s1630 = smul.addr %s1629, 16
        %s1631 = scalar_lea.vmem [#allocation11], %s1630
        // Predicated region
        $region81: #{tpu_custom_call.1} parent=59 // pred_check
          %p1632 = pneg %p284
        $region82: #{tpu_custom_call.1} parent=59 // pred_check_branch
          %1634 = sbr.rel (%p1632) target = $region84
        $region83: #{tpu_custom_call.1} parent=59 // pred_region
          %1636 = vsyncadd %s1628, 0
          %s1637 = smul.addr %s31, 2
          %s1638 = smul.addr %s1637, 8
          %s1639 = scalar_lea.hbm %s10, %s1638
          %s1640 = sshll.u32 %s1631, 4
          %s1641 = int_to_ptr.vmem [resolvable:$true] %s1640
          %s1642 = sshll.u32 %s1639, 4
          %s1643 = int_to_ptr.hbm [resolvable:$true] %s1642
          %1648 = dma.vmem_to_hbm [thread:$0]  %s1641, 256, %s1643, %s1628, 128, 128, 8
        $region84: #{tpu_custom_call.1} parent=59 // pred_fallthru
          _
      $region60: #{tpu_custom_call.1} parent=5 // pred_fallthru
        _
      %p1649 = scmp.le.s32.totalorder 2, %s26
      // Predicated region
      $region85: #{tpu_custom_call.1} parent=5 // pred_check
        %p1650 = pneg %p1649
      $region86: #{tpu_custom_call.1} parent=5 // pred_check_branch
        %1652 = sbr.rel (%p1650) target = $region88
      $region87: #{tpu_custom_call.1} parent=5 // pred_region
        %s1653 = ssub.s32 %s26, 2
        // Predicated region
        $region89: #{tpu_custom_call.1} parent=87 // pred_check
          %p1654 = pneg %p290
        $region90: #{tpu_custom_call.1} parent=87 // pred_check_branch
          %1656 = sbr.rel (%p1654) target = $region92
        $region91: #{tpu_custom_call.1} parent=87 // pred_region
          %s1657 = sand.u32 %s275, 1
          %s1658 = scalar_lea.sflag [#allocation4], %s1657
          %s1659 = sand.u32 %s275, 1
          %s1660 = smul.addr %s1659, 16
          %s1661 = scalar_lea.vmem [#allocation11], %s1660
          %1663 = dma.done %s1658, 256
        $region92: #{tpu_custom_call.1} parent=87 // pred_fallthru
          _
      $region88: #{tpu_custom_call.1} parent=5 // pred_fallthru
        _
    $region6: #{tpu_custom_call.1} parent=1 // loop_footer
      %s30 = sadd.s32 1, %s26
    $region7: #{tpu_custom_call.1} parent=1 // loop_footer_branch
      %25 = sbr.rel target = $region3
    $region8: #{tpu_custom_call.1} parent=1 // loop_exit
      _
    %1664 = vsyncpa [#allocation3], 1
    %s1665 = scalar_lea.sflag [#allocation3], 1
    %1666 = vsyncpa %s1665, 1
    %1667 = vsyncpa [#allocation6], 1
    %s1668 = scalar_lea.sflag [#allocation6], 1
    %1669 = vsyncpa %s1668, 1
    %1670 = vsyncpa [#allocation9], 1
    %1671 = vsyncpa [#allocation4], 1
    %s1672 = scalar_lea.sflag [#allocation4], 1
    %1673 = vsyncpa %s1672, 1

</llo_original>
